<compile_context>
chip_gen: v6e
topology: v6e:2x2x1
jax: 0.10.0
libtpu: 0.0.40
codegen_flags: <defaults>
</compile_context>

<pallas_src>
import functools

import jax
import jax.numpy as jnp
from jax.experimental import pallas as pl
from jax.experimental.pallas import tpu as pltpu


def modified_clip_adapter_kernel(x_ref, w1t_ref, w2t_ref, o_ref, *, ratio):
    # ---- L2 normalize over the feature (last) axis, in f32 ------------------
    x = x_ref[...].astype(jnp.float32)                       # (bn, C)
    sumsq = jnp.sum(x * x, axis=-1, keepdims=True)           # (bn, 1)
    # rsqrt on the EUP slot; identical to x / max(||x||_2, 1e-12) (F.normalize).
    xn = x * jax.lax.rsqrt(jnp.maximum(sumsq, 1e-24))

    # ---- fc: Linear -> ReLU -> Dropout(identity) -> Linear -> ReLU ----------
    # bf16 inputs on the MXU, f32 accumulation.
    h = jnp.dot(xn.astype(jnp.bfloat16), w1t_ref[...],
                preferred_element_type=jnp.float32)          # (bn, H)
    h = jnp.maximum(h, 0.0)
    # TODO(synk): nn.Dropout(0.5) is identity at inference; training-mode
    # stochastic dropout would need pltpu.prng_seed/prng_random_bits masking.
    y = jnp.dot(h.astype(jnp.bfloat16), w2t_ref[...],
                preferred_element_type=jnp.float32)          # (bn, C)
    y = jnp.maximum(y, 0.0)

    # ---- residual mix with the *normalized* input ----------------------------
    out = ratio * y + (1.0 - ratio) * xn
    o_ref[...] = out.astype(o_ref.dtype)


def prepare_adapter_params(w1, w2, *, compute_dtype=jnp.bfloat16):
    """One-time (parameter-load-time) transform of PyTorch nn.Linear weights.

    w1: (H, C) = (c_in//reduction, c_in)   ->  w1t: (C, H), compute_dtype
    w2: (C, H)                             ->  w2t: (H, C), compute_dtype

    Do NOT call this per forward pass: keeping the transposed/bf16 copies as the
    stored params avoids per-call XLA transposes + extra HBM round trips.
    """
    w1t = jnp.asarray(w1).T.astype(compute_dtype)
    w2t = jnp.asarray(w2).T.astype(compute_dtype)
    return w1t, w2t


def _vmem_cap_bytes():
    """Chip-aware VMEM ceiling: ~48 MiB on v7x (64 MiB physical), ~96 MiB on v5e/v6e."""
    try:
        phys = int(pltpu.get_tpu_info().vmem_capacity_bytes)
    except Exception:
        phys = 64 << 20            # conservative fallback = v7x per-TC VMEM
    return min(int(phys * 3 // 4), 96 << 20)


def _budget_bytes(block_n, C, H, x_itemsize, out_itemsize, w_itemsize):
    """VMEM needed for one grid step, including bf16 cast temporaries."""
    io_tiles = 2 * block_n * C * (x_itemsize + out_itemsize)   # x + out, double-buffered
    weights = 2 * 2 * C * H * w_itemsize                       # w1t + w2t, double-buffered
    f32_tmp = block_n * (3 * C + H) * 4                        # xn, y, out (f32) + h (f32)
    bf16_tmp = block_n * (C + H) * 2                           # xn/h bf16 casts before each dot
    return io_tiles + weights + f32_tmp + bf16_tmp + (4 << 20)  # + headroom


def _choose_block_n(N, C, H, x_itemsize, out_itemsize, w_itemsize, target):
    """Largest sublane-aligned row tile that fits the VMEM cap, with >=2 grid steps."""
    cap = _vmem_cap_bytes()
    per_row = (2 * C * (x_itemsize + out_itemsize)      # I/O tiles (double-buffered)
               + (3 * C + H) * 4                        # f32 temporaries
               + (C + H) * 2)                           # bf16 cast temporaries
    fixed = 2 * 2 * C * H * w_itemsize + (4 << 20)
    max_rows = max(8, ((cap - fixed) // per_row) // 8 * 8)

    block_n = min(max(8, (target // 8) * 8), max_rows)

    if N < 16:
        # Tiny batch: a single full-array block (block_shape == full dim is legal).
        return N
    # Guarantee >= 2 grid steps so v7x's second TensorCore gets work and the
    # x/out DMAs overlap compute per core.
    two_step = max(8, ((pl.cdiv(N, 2) + 7) // 8) * 8)
    return min(block_n, two_step)


def modified_clip_adapter(x, w1t, w2t, *, ratio=0.6, block_n=None,
                          out_dtype=None, vmem_limit_bytes=None):
    """x: (N, C); w1t: (C, H); w2t: (H, C) — weights from prepare_adapter_params.

    x may be f32 or bf16 (normalization math is always done in f32).
    out_dtype defaults to x.dtype; pass jnp.bfloat16 to halve output HBM traffic.
    """
    N, C = x.shape
    Cw, H = w1t.shape
    assert Cw == C and w2t.shape == (H, C), "weight shapes inconsistent with x"
    # Lane-dense output is the biggest measured single lever: require C % 128.
    assert C % 128 == 0, f"feature dim C={C} must be a multiple of 128 (pad upstream)"
    assert H % 8 == 0, f"hidden dim H={H} must be a multiple of 8"

    out_dtype = x.dtype if out_dtype is None else out_dtype
    x_it = jnp.dtype(x.dtype).itemsize
    o_it = jnp.dtype(out_dtype).itemsize
    w_it = jnp.dtype(w1t.dtype).itemsize

    target = 2048 if block_n is None else int(block_n)
    block_n = _choose_block_n(N, C, H, x_it, o_it, w_it, target)
    grid = (pl.cdiv(N, block_n),)

    if vmem_limit_bytes is None:
        vmem_limit_bytes = max(_budget_bytes(block_n, C, H, x_it, o_it, w_it),
                               32 * 1024 * 1024)

    kernel = functools.partial(modified_clip_adapter_kernel, ratio=float(ratio))

    return pl.pallas_call(
        kernel,
        out_shape=jax.ShapeDtypeStruct((N, C), out_dtype),
        grid_spec=pltpu.PrefetchScalarGridSpec(
            num_scalar_prefetch=0,
            grid=grid,
            in_specs=[
                pl.BlockSpec((block_n, C), lambda i: (i, 0)),  # x tile (pipelined)
                pl.BlockSpec((C, H), lambda i: (0, 0)),        # w1t, VMEM-resident
                pl.BlockSpec((H, C), lambda i: (0, 0)),        # w2t, VMEM-resident
            ],
            out_specs=pl.BlockSpec((block_n, C), lambda i: (i, 0)),
        ),
        compiler_params=pltpu.CompilerParams(
            dimension_semantics=("parallel",),
            vmem_limit_bytes=int(vmem_limit_bytes),
        ),
    )(x, w1t, w2t)


def _reference(x, w1, w2, ratio):
    """Plain-JAX f32 reference of the eval-mode forward pass."""
    x = x.astype(jnp.float32)
    xn = x / jnp.maximum(jnp.linalg.norm(x, axis=-1, keepdims=True), 1e-12)
    y = jnp.maximum(jnp.maximum(xn @ w1.T, 0.0) @ w2.T, 0.0)
    return ratio * y + (1.0 - ratio) * xn


if __name__ == "__main__":
    # Small-but-realistic shapes consistent with ModifiedClipAdapter(c_in=512, reduction=4)
    C_IN, REDUCTION, RATIO = 512, 4, 0.6
    H = C_IN // REDUCTION          # 128
    N = 256                        # auto tile -> block_n=128, grid=(2,), both cores busy

    key = jax.random.PRNGKey(0)
    kx, k1, k2 = jax.random.split(key, 3)
    x = jax.random.normal(kx, (N, C_IN), dtype=jnp.float32)
    # Deterministic synthetic weights in PyTorch nn.Linear layout: (out, in)
    w1 = jax.random.normal(k1, (H, C_IN), dtype=jnp.float32) * (1.0 / jnp.sqrt(C_IN))
    w2 = jax.random.normal(k2, (C_IN, H), dtype=jnp.float32) * (1.0 / jnp.sqrt(H))

    # One-time weight prep (transpose + bf16) — outside the per-call hot path.
    w1t, w2t = prepare_adapter_params(w1, w2)

    # --- main run (f32 in / f32 out) -----------------------------------------
    out = modified_clip_adapter(x, w1t, w2t, ratio=RATIO)
    out = jax.block_until_ready(out)
    ref = _reference(x, w1, w2, RATIO)
    assert out.shape == (N, C_IN)
    # bf16 matmul inputs (f32 accumulation) -> intentionally looser tolerance
    # than a pure-f32 path; acceptable precision tradeoff for ~2x I/O win.
    assert jnp.allclose(out, ref, atol=1e-2, rtol=1e-2), float(jnp.max(jnp.abs(out - ref)))

    # --- non-divisible N: partial last row tile must not leak stale/NaN data --
    N2 = 200                       # auto tile -> block_n=104, grid=(2,), 96-row tail
    x2 = jax.random.normal(jax.random.PRNGKey(1), (N2, C_IN), dtype=jnp.float32)
    out2 = jax.block_until_ready(modified_clip_adapter(x2, w1t, w2t, ratio=RATIO))
    ref2 = _reference(x2, w1, w2, RATIO)
    assert out2.shape == (N2, C_IN)
    assert bool(jnp.all(jnp.isfinite(out2)))
    assert jnp.allclose(out2, ref2, atol=1e-2, rtol=1e-2), float(jnp.max(jnp.abs(out2 - ref2)))

    # --- bf16 I/O path (halves the dominant HBM stream) -----------------------
    out_bf16 = modified_clip_adapter(x.astype(jnp.bfloat16), w1t, w2t,
                                     ratio=RATIO, out_dtype=jnp.bfloat16)
    out_bf16 = jax.block_until_ready(out_bf16)
    assert out_bf16.dtype == jnp.bfloat16 and out_bf16.shape == (N, C_IN)
    assert jnp.allclose(out_bf16.astype(jnp.float32), ref, atol=3e-2, rtol=3e-2)

    print("KERNEL_OK")
</pallas_src>

<mosaic_0001>
module attributes {stable_mosaic.version = 11 : i64} {
  func.func @modified_clip_adapter_kernel(%arg0: i32, %arg1: memref<128x512xf32, #tpu.memory_space<vmem>>, %arg2: memref<512x128xbf16, #tpu.memory_space<vmem>>, %arg3: memref<128x512xbf16, #tpu.memory_space<vmem>>, %arg4: memref<128x512xf32, #tpu.memory_space<vmem>>) attributes {dimension_semantics = [#tpu.dimension_semantics<parallel>], iteration_bounds = array<i64: 2>, scalar_prefetch = 0 : i64, scratch_operands = 0 : i64, tpu.core_type = #tpu.core_type<tc>, window_params = [{transform_indices = @transform_0, window_bounds = array<i64: 128, 512>}, {pipeline_mode = #tpu.pipeline_mode<synchronous>, transform_indices = @transform_1, window_bounds = array<i64: 512, 128>}, {pipeline_mode = #tpu.pipeline_mode<synchronous>, transform_indices = @transform_2, window_bounds = array<i64: 128, 512>}, {transform_indices = @transform_3, window_bounds = array<i64: 128, 512>}]} {
    %c0 = arith.constant 0 : index
    %c0_0 = arith.constant 0 : index
    %0 = vector.load %arg1[%c0, %c0_0] : memref<128x512xf32, #tpu.memory_space<vmem>>, vector<128x512xf32>
    %1 = arith.mulf %0, %0 : vector<128x512xf32>
    %cst = arith.constant dense<0.000000e+00> : vector<128xf32>
    %2 = vector.multi_reduction <add>, %1, %cst [1] : vector<128x512xf32> to vector<128xf32>
    %3 = vector.shape_cast %2 : vector<128xf32> to vector<128x1xf32>
    %cst_1 = arith.constant 1.000000e-24 : f32
    %4 = vector.broadcast %cst_1 : f32 to vector<128x1xf32>
    %5 = arith.maximumf %3, %4 : vector<128x1xf32>
    %6 = math.rsqrt %5 : vector<128x1xf32>
    %7 = vector.broadcast %6 : vector<128x1xf32> to vector<128x512xf32>
    %8 = arith.mulf %0, %7 : vector<128x512xf32>
    %9 = arith.truncf %8 : vector<128x512xf32> to vector<128x512xbf16>
    %c0_2 = arith.constant 0 : index
    %c0_3 = arith.constant 0 : index
    %10 = vector.load %arg2[%c0_2, %c0_3] : memref<512x128xbf16, #tpu.memory_space<vmem>>, vector<512x128xbf16>
    %cst_4 = arith.constant dense<0.000000e+00> : vector<128x128xf32>
    %11 = tpu.matmul %9, %10, %cst_4 {dimension_numbers = #tpu.dot_dimension_numbers<[1], [0], [0], [1], [0, 0, 1, 1], [], []>} : vector<128x512xbf16>, vector<512x128xbf16>, vector<128x128xf32> -> vector<128x128xf32>
    %cst_5 = arith.constant 0.000000e+00 : f32
    %12 = vector.broadcast %cst_5 : f32 to vector<128x128xf32>
    %13 = arith.maximumf %11, %12 : vector<128x128xf32>
    %14 = arith.truncf %13 : vector<128x128xf32> to vector<128x128xbf16>
    %c0_6 = arith.constant 0 : index
    %c0_7 = arith.constant 0 : index
    %15 = vector.load %arg3[%c0_6, %c0_7] : memref<128x512xbf16, #tpu.memory_space<vmem>>, vector<128x512xbf16>
    %cst_8 = arith.constant dense<0.000000e+00> : vector<128x512xf32>
    %16 = tpu.matmul %14, %15, %cst_8 {dimension_numbers = #tpu.dot_dimension_numbers<[1], [0], [0], [1], [0, 0, 1, 1], [], []>} : vector<128x128xbf16>, vector<128x512xbf16>, vector<128x512xf32> -> vector<128x512xf32>
    %cst_9 = arith.constant 0.000000e+00 : f32
    %17 = vector.broadcast %cst_9 : f32 to vector<128x512xf32>
    %18 = arith.maximumf %16, %17 : vector<128x512xf32>
    %cst_10 = arith.constant 6.000000e-01 : f32
    %19 = vector.broadcast %cst_10 : f32 to vector<128x512xf32>
    %20 = arith.mulf %19, %18 : vector<128x512xf32>
    %cst_11 = arith.constant 4.000000e-01 : f32
    %21 = vector.broadcast %cst_11 : f32 to vector<128x512xf32>
    %22 = arith.mulf %21, %8 : vector<128x512xf32>
    %23 = arith.addf %20, %22 : vector<128x512xf32>
    %c0_12 = arith.constant 0 : index
    %c0_13 = arith.constant 0 : index
    %24 = vector.load %arg4[%c0_12, %c0_13] : memref<128x512xf32, #tpu.memory_space<vmem>>, vector<128x512xf32>
    tpu.vector_store %arg4[%c0_12, %c0_13], %23 {strides = array<i32>} : memref<128x512xf32, #tpu.memory_space<vmem>>, vector<128x512xf32>,
    return
  }
  func.func @transform_0(%arg0: i32) -> (i32, i32) {
    %c0_i32 = arith.constant 0 : i32
    %c0_i32_0 = arith.constant 0 : i32
    return %arg0, %c0_i32 : i32, i32
  }
  func.func @transform_1(%arg0: i32) -> (i32, i32) {
    %c0_i32 = arith.constant 0 : i32
    %c0_i32_0 = arith.constant 0 : i32
    %c0_i32_1 = arith.constant 0 : i32
    return %c0_i32, %c0_i32_0 : i32, i32
  }
  func.func @transform_2(%arg0: i32) -> (i32, i32) {
    %c0_i32 = arith.constant 0 : i32
    %c0_i32_0 = arith.constant 0 : i32
    %c0_i32_1 = arith.constant 0 : i32
    return %c0_i32, %c0_i32_0 : i32, i32
  }
  func.func @transform_3(%arg0: i32) -> (i32, i32) {
    %c0_i32 = arith.constant 0 : i32
    %c0_i32_0 = arith.constant 0 : i32
    return %arg0, %c0_i32 : i32, i32
  }
}

</mosaic_0001>

<llo_original>
// kernel: tpu_custom_call.1
$region0: #{tpu_custom_call.1}
  #allocation0 [shape = 'u32[]', space=smem, size = 0x4, offset = 0x4, fixed_abs, tag = 'smem constant byte address 0x4 - core index']
  #allocation1 [shape = 'u32[144,128]{1,0:T(1,128)}', space=vmem, size = 0x12000, scoped, tag = 'internal scratch']
  %s0 = inlined_call_operand.hbm [shape: f32[256,512], index: 0, kind: input, shape index: {}]
  %s1 = inlined_call_operand.hbm [shape: bf16[512,128], index: 1, kind: input, shape index: {}]
  %s2 = inlined_call_operand.hbm [shape: bf16[128,512], index: 2, kind: input, shape index: {}]
  %s3 = inlined_call_operand.hbm [shape: f32[256,512], index: 3, kind: output, shape index: {}]
  %s4 = sld [smem:[#allocation0]]
  $region57: #{tpu_custom_call.1} parent=0
    _
  %s6 = ssub.s32 1, %s4
  %s7 = scalar_select 0, %s6, %s4
  $region1: #{tpu_custom_call.1} parent=0
    #allocation2 [shape = 'u8[524288]{0}', space=vmem, size = 0x80000, scoped, tag = 'input window, operand 0']
    #allocation3 [shape = 's32[2]{0}', space=sflag, size = 0x8, scoped, tag = 'scoped memory for tpu_custom_call.1']
    #allocation4 [shape = 's32[2]{0}', space=sflag, size = 0x8, scoped, tag = 'scoped memory for tpu_custom_call.1']
    #allocation5 [shape = 'u8[131072]{0}', space=vmem, size = 0x20000, scoped, tag = 'input window, operand 1, single buffered']
    #allocation6 [shape = 's32[1]{0}', space=sflag, size = 0x4, scoped, tag = 'scoped memory for tpu_custom_call.1']
    #allocation7 [shape = 'u8[131072]{0}', space=vmem, size = 0x20000, scoped, tag = 'input window, operand 2, single buffered']
    #allocation8 [shape = 'u8[524288]{0}', space=vmem, size = 0x80000, scoped, tag = 'output window, operand 0']
    %8 = vsyncpa [#allocation3], 0
    %s9 = scalar_lea.sflag [#allocation3], 1
    %10 = vsyncpa %s9, 0
    %11 = vsyncpa [#allocation6], 0
    %12 = vsyncpa [#allocation4], 0
    %s13 = scalar_lea.sflag [#allocation4], 1
    %14 = vsyncpa %s13, 0
    loop: start=0, step=1, limit=4
    $region2: #{tpu_custom_call.1} parent=1 // loop_pre_header
      _
    $region3: #{tpu_custom_call.1} parent=1 // loop_header
      %s16 = sphi 0, %s20
      %p17 = scmp.ge.s32.totalorder %s16, 4
      %s26 = sphi 0, %s28
      %s29 = sphi 0, %s26
      %s30 = sphi 0, %s29
      %s46 = sphi 0, %s30
      %s50 = sphi 0, %s50
      %s52 = sphi 0, %s50
      %s53 = sphi 0, %s52
      %s67 = sphi 0, %s53
      %s71 = sphi 0, %s71
      %s73 = sphi 0, %s71
      %s74 = sphi 0, %s73
      %s88 = sphi 0, %s74
      %s94 = sphi 0, %s96
      %s97 = sphi 0, %s94
      %s98 = sphi 0, %s97
      %s114 = sphi 0, %s98
    $region4: #{tpu_custom_call.1} parent=1 // loop_header_branch
      %19 = sbr.rel (%p17) target = $region8
    $region5: #{tpu_custom_call.1} parent=1 // loop_body
      %s21 = ssub.s32 %s16, 1
      %s22 = ssub.s32 %s16, 2
      %s23 = sadd.s32 %s16, 1
      %s24 = ssub.s32 %s16, %s23
      %p25 = scmp.eq.s32.totalorder %s24, 0
      %s27 = sadd.s32 %s26, 1
      %s28 = scalar_select %p25, %s26, %s27
      %p31 = pneg %p25
      %p32 = scmp.eq.s32.totalorder %s16, 1
      %p33 = por %p31, %p32
      %p34 = scmp.ne.s32.totalorder %s26, %s29
      %p35 = scmp.eq.s32.totalorder %s16, 0
      %p36 = por %p34, %p35
      %p37 = scmp.ne.s32.totalorder %s26, %s29
      %p38 = scmp.eq.s32.totalorder %s21, 1
      %p39 = por %p37, %p38
      %p40 = scmp.ne.s32.totalorder %s29, %s30
      %p41 = scmp.eq.s32.totalorder %s21, 0
      %p42 = por %p40, %p41
      %p43 = scmp.ne.s32.totalorder %s29, %s30
      %p44 = scmp.eq.s32.totalorder %s22, 1
      %p45 = por %p43, %p44
      %p47 = scmp.ne.s32.totalorder %s30, %s46
      %p48 = scmp.eq.s32.totalorder %s22, 0
      %p49 = por %p47, %p48
      %s51 = sadd.s32 %s50, 1
      %p54 = scmp.eq.s32.totalorder %s16, 1
      %p55 = scmp.ne.s32.totalorder %s50, %s52
      %p56 = scmp.eq.s32.totalorder %s16, 0
      %p57 = por %p55, %p56
      %p58 = scmp.ne.s32.totalorder %s50, %s52
      %p59 = scmp.eq.s32.totalorder %s21, 1
      %p60 = por %p58, %p59
      %p61 = scmp.ne.s32.totalorder %s52, %s53
      %p62 = scmp.eq.s32.totalorder %s21, 0
      %p63 = por %p61, %p62
      %p64 = scmp.ne.s32.totalorder %s52, %s53
      %p65 = scmp.eq.s32.totalorder %s22, 1
      %p66 = por %p64, %p65
      %p68 = scmp.ne.s32.totalorder %s53, %s67
      %p69 = scmp.eq.s32.totalorder %s22, 0
      %p70 = por %p68, %p69
      %s72 = sadd.s32 %s71, 1
      %p75 = scmp.eq.s32.totalorder %s16, 1
      %p76 = scmp.ne.s32.totalorder %s71, %s73
      %p77 = scmp.eq.s32.totalorder %s16, 0
      %p78 = por %p76, %p77
      %p79 = scmp.ne.s32.totalorder %s71, %s73
      %p80 = scmp.eq.s32.totalorder %s21, 1
      %p81 = por %p79, %p80
      %p82 = scmp.ne.s32.totalorder %s73, %s74
      %p83 = scmp.eq.s32.totalorder %s21, 0
      %p84 = por %p82, %p83
      %p85 = scmp.ne.s32.totalorder %s73, %s74
      %p86 = scmp.eq.s32.totalorder %s22, 1
      %p87 = por %p85, %p86
      %p89 = scmp.ne.s32.totalorder %s74, %s88
      %p90 = scmp.eq.s32.totalorder %s22, 0
      %p91 = por %p89, %p90
      %s92 = ssub.s32 %s16, %s23
      %p93 = scmp.eq.s32.totalorder %s92, 0
      %s95 = sadd.s32 %s94, 1
      %s96 = scalar_select %p93, %s94, %s95
      %p99 = pneg %p93
      %p100 = scmp.eq.s32.totalorder %s16, 1
      %p101 = por %p99, %p100
      %p102 = scmp.ne.s32.totalorder %s94, %s97
      %p103 = scmp.eq.s32.totalorder %s16, 0
      %p104 = por %p102, %p103
      %p105 = scmp.ne.s32.totalorder %s94, %s97
      %p106 = scmp.eq.s32.totalorder %s21, 1
      %p107 = por %p105, %p106
      %p108 = scmp.ne.s32.totalorder %s97, %s98
      %p109 = scmp.eq.s32.totalorder %s21, 0
      %p110 = por %p108, %p109
      %p111 = scmp.ne.s32.totalorder %s97, %s98
      %p112 = scmp.eq.s32.totalorder %s22, 1
      %p113 = por %p111, %p112
      %p115 = scmp.ne.s32.totalorder %s98, %s114
      %p116 = scmp.eq.s32.totalorder %s22, 0
      %p117 = por %p115, %p116
      %p118 = scmp.le.s32.totalorder 1, %s16
      %p119 = scmp.lt.s32.totalorder %s16, 3
      %p120 = pnand %p118, %p119
      %p121 = pneg %p120
      // Predicated region
      $region9: #{tpu_custom_call.1} parent=5 // pred_check
        _
      $region10: #{tpu_custom_call.1} parent=5 // pred_check_branch
        %123 = sbr.rel (%p120) target = $region12
      $region11: #{tpu_custom_call.1} parent=5 // pred_region
        %s124 = ssub.s32 %s16, 1
        // Predicated region
        $region13: #{tpu_custom_call.1} parent=11 // pred_check
          %p125 = pneg %p63
        $region14: #{tpu_custom_call.1} parent=11 // pred_check_branch
          %127 = sbr.rel (%p125) target = $region16
        $region15: #{tpu_custom_call.1} parent=11 // pred_region
          %s129 = ssub.s32 4096, 4096
          %130 = vsyncadd [#allocation6], %s129
          %s131 = sshll.u32 [#allocation5], 4
          %s132 = int_to_ptr.vmem [resolvable:$true] %s131
          %137 = dma.hbm_to_vmem [thread:$0]  %s1, 4096, %s132, [#allocation6], 64, 64, 4
        $region16: #{tpu_custom_call.1} parent=11 // pred_fallthru
          _
        // Predicated region
        $region17: #{tpu_custom_call.1} parent=11 // pred_check
          %p138 = pneg %p84
        $region18: #{tpu_custom_call.1} parent=11 // pred_check_branch
          %140 = sbr.rel (%p138) target = $region20
        $region19: #{tpu_custom_call.1} parent=11 // pred_region
          %s142 = ssub.s32 4096, 4096
          %143 = vsyncadd [#allocation6], %s142
          %s144 = sshll.u32 [#allocation7], 4
          %s145 = int_to_ptr.vmem [resolvable:$true] %s144
          %150 = dma.hbm_to_vmem [thread:$0]  %s2, 4096, %s145, [#allocation6], 256, 256, 16
        $region20: #{tpu_custom_call.1} parent=11 // pred_fallthru
          _
      $region12: #{tpu_custom_call.1} parent=5 // pred_fallthru
        _
      %p151 = scmp.lt.s32.totalorder %s16, 2
      // Predicated region
      $region21: #{tpu_custom_call.1} parent=5 // pred_check
        %p152 = pneg %p151
      $region22: #{tpu_custom_call.1} parent=5 // pred_check_branch
        %154 = sbr.rel (%p152) target = $region24
      $region23: #{tpu_custom_call.1} parent=5 // pred_region
        // Predicated region
        $region25: #{tpu_custom_call.1} parent=23 // pred_check
          %p155 = pneg %p36
        $region26: #{tpu_custom_call.1} parent=23 // pred_check_branch
          %157 = sbr.rel (%p155) target = $region28
        $region27: #{tpu_custom_call.1} parent=23 // pred_region
          %s158 = sand.u32 %s26, 1
          %s159 = scalar_lea.sflag [#allocation3], %s158
          %s160 = sand.u32 %s26, 1
          %s161 = smul.addr %s160, 512
          %s162 = scalar_lea.vmem [#allocation2], %s161
          %s163 = smul.u32 16, %s16
          %s165 = ssub.s32 8192, 8192
          %166 = vsyncadd %s159, %s165
          %s167 = smul.addr %s163, 4
          %s168 = smul.addr %s167, 128
          %s169 = scalar_lea.hbm %s0, %s168
          %s170 = sshll.u32 %s162, 4
          %s171 = int_to_ptr.vmem [resolvable:$true] %s170
          %176 = dma.hbm_to_vmem [thread:$0]  %s169, 8192, %s171, %s159, 512, 512, 32
        $region28: #{tpu_custom_call.1} parent=23 // pred_fallthru
          _
      $region24: #{tpu_custom_call.1} parent=5 // pred_fallthru
        _
      %p177 = scmp.le.s32.totalorder 1, %s16
      %p178 = scmp.lt.s32.totalorder %s16, 3
      %p179 = pnand %p177, %p178
      %p180 = pneg %p179
      // Predicated region
      $region29: #{tpu_custom_call.1} parent=5 // pred_check
        _
      $region30: #{tpu_custom_call.1} parent=5 // pred_check_branch
        %182 = sbr.rel (%p179) target = $region32
      $region31: #{tpu_custom_call.1} parent=5 // pred_region
        %s183 = ssub.s32 %s16, 1
        %s184 = sand.u32 %s29, 1
        %s185 = scalar_lea.sflag [#allocation3], %s184
        %s186 = sand.u32 %s29, 1
        %s187 = smul.addr %s186, 512
        %s188 = scalar_lea.vmem [#allocation2], %s187
        // Predicated region
        $region33: #{tpu_custom_call.1} parent=31 // pred_check
          %p189 = pneg %p42
        $region34: #{tpu_custom_call.1} parent=31 // pred_check_branch
          %191 = sbr.rel (%p189) target = $region36
        $region35: #{tpu_custom_call.1} parent=31 // pred_region
          %192 = dma.done %s185, 8192
        $region36: #{tpu_custom_call.1} parent=31 // pred_fallthru
          _
        // Predicated region
        $region37: #{tpu_custom_call.1} parent=31 // pred_check
          %p193 = pneg %p63
        $region38: #{tpu_custom_call.1} parent=31 // pred_check_branch
          %195 = sbr.rel (%p193) target = $region40
        $region39: #{tpu_custom_call.1} parent=31 // pred_region
          %196 = dma.done [#allocation6], 4096
        $region40: #{tpu_custom_call.1} parent=31 // pred_fallthru
          _
        // Predicated region
        $region41: #{tpu_custom_call.1} parent=31 // pred_check
          %p197 = pneg %p84
        $region42: #{tpu_custom_call.1} parent=31 // pred_check_branch
          %199 = sbr.rel (%p197) target = $region44
        $region43: #{tpu_custom_call.1} parent=31 // pred_region
          %200 = dma.done [#allocation6], 4096
        $region44: #{tpu_custom_call.1} parent=31 // pred_fallthru
          _
        %s201 = sand.u32 %s29, 1
        %s202 = scalar_lea.sflag [#allocation3], %s201
        %s203 = sand.u32 %s29, 1
        %s204 = smul.addr %s203, 512
        %s205 = scalar_lea.vmem [#allocation2], %s204
        %p206 = pneg %p42
        %p207 = pneg %p39
        %p208 = pneg %p63
        %p209 = pneg %p60
        %p210 = pneg %p84
        %p211 = pneg %p81
        %p212 = pneg %p110
        %p213 = pneg %p107
        %s214 = sand.u32 %s97, 1
        %s215 = scalar_lea.sflag [#allocation4], %s214
        %s216 = sand.u32 %s97, 1
        %s217 = smul.addr %s216, 512
        %s218 = scalar_lea.vmem [#allocation8], %s217
        %s219 = smul.u32 16, %s21
        %s220 = smul.u32 16, %s21
        %v222 = vld [vmem:[%s188] sm:$0xff]
        %v223 = vld [vmem:[%s188 + $0x8] sm:$0xff]
        %v224 = vld [vmem:[%s188 + $0x10] sm:$0xff]
        %v225 = vld [vmem:[%s188 + $0x18] sm:$0xff]
        %v226 = vld [vmem:[%s188 + $0x20] sm:$0xff]
        %v227 = vld [vmem:[%s188 + $0x28] sm:$0xff]
        %v228 = vld [vmem:[%s188 + $0x30] sm:$0xff]
        %v229 = vld [vmem:[%s188 + $0x38] sm:$0xff]
        %v230 = vld [vmem:[%s188 + $0x40] sm:$0xff]
        %v231 = vld [vmem:[%s188 + $0x48] sm:$0xff]
        %v232 = vld [vmem:[%s188 + $0x50] sm:$0xff]
        %v233 = vld [vmem:[%s188 + $0x58] sm:$0xff]
        %v234 = vld [vmem:[%s188 + $0x60] sm:$0xff]
        %v235 = vld [vmem:[%s188 + $0x68] sm:$0xff]
        %v236 = vld [vmem:[%s188 + $0x70] sm:$0xff]
        %v237 = vld [vmem:[%s188 + $0x78] sm:$0xff]
        %v238 = vld [vmem:[%s188 + $0x80] sm:$0xff]
        %v239 = vld [vmem:[%s188 + $0x88] sm:$0xff]
        %v240 = vld [vmem:[%s188 + $0x90] sm:$0xff]
        %v241 = vld [vmem:[%s188 + $0x98] sm:$0xff]
        %v242 = vld [vmem:[%s188 + $0xa0] sm:$0xff]
        %v243 = vld [vmem:[%s188 + $0xa8] sm:$0xff]
        %v244 = vld [vmem:[%s188 + $0xb0] sm:$0xff]
        %v245 = vld [vmem:[%s188 + $0xb8] sm:$0xff]
        %v246 = vld [vmem:[%s188 + $0xc0] sm:$0xff]
        %v247 = vld [vmem:[%s188 + $0xc8] sm:$0xff]
        %v248 = vld [vmem:[%s188 + $0xd0] sm:$0xff]
        %v249 = vld [vmem:[%s188 + $0xd8] sm:$0xff]
        %v250 = vld [vmem:[%s188 + $0xe0] sm:$0xff]
        %v251 = vld [vmem:[%s188 + $0xe8] sm:$0xff]
        %v252 = vld [vmem:[%s188 + $0xf0] sm:$0xff]
        %v253 = vld [vmem:[%s188 + $0xf8] sm:$0xff]
        %v254 = vld [vmem:[%s188 + $0x100] sm:$0xff]
        %v255 = vld [vmem:[%s188 + $0x108] sm:$0xff]
        %v256 = vld [vmem:[%s188 + $0x110] sm:$0xff]
        %v257 = vld [vmem:[%s188 + $0x118] sm:$0xff]
        %v258 = vld [vmem:[%s188 + $0x120] sm:$0xff]
        %v259 = vld [vmem:[%s188 + $0x128] sm:$0xff]
        %v260 = vld [vmem:[%s188 + $0x130] sm:$0xff]
        %v261 = vld [vmem:[%s188 + $0x138] sm:$0xff]
        %v262 = vld [vmem:[%s188 + $0x140] sm:$0xff]
        %v263 = vld [vmem:[%s188 + $0x148] sm:$0xff]
        %v264 = vld [vmem:[%s188 + $0x150] sm:$0xff]
        %v265 = vld [vmem:[%s188 + $0x158] sm:$0xff]
        %v266 = vld [vmem:[%s188 + $0x160] sm:$0xff]
        %v267 = vld [vmem:[%s188 + $0x168] sm:$0xff]
        %v268 = vld [vmem:[%s188 + $0x170] sm:$0xff]
        %v269 = vld [vmem:[%s188 + $0x178] sm:$0xff]
        %v270 = vld [vmem:[%s188 + $0x180] sm:$0xff]
        %v271 = vld [vmem:[%s188 + $0x188] sm:$0xff]
        %v272 = vld [vmem:[%s188 + $0x190] sm:$0xff]
        %v273 = vld [vmem:[%s188 + $0x198] sm:$0xff]
        %v274 = vld [vmem:[%s188 + $0x1a0] sm:$0xff]
        %v275 = vld [vmem:[%s188 + $0x1a8] sm:$0xff]
        %v276 = vld [vmem:[%s188 + $0x1b0] sm:$0xff]
        %v277 = vld [vmem:[%s188 + $0x1b8] sm:$0xff]
        %v278 = vld [vmem:[%s188 + $0x1c0] sm:$0xff]
        %v279 = vld [vmem:[%s188 + $0x1c8] sm:$0xff]
        %v280 = vld [vmem:[%s188 + $0x1d0] sm:$0xff]
        %v281 = vld [vmem:[%s188 + $0x1d8] sm:$0xff]
        %v282 = vld [vmem:[%s188 + $0x1e0] sm:$0xff]
        %v283 = vld [vmem:[%s188 + $0x1e8] sm:$0xff]
        %v284 = vld [vmem:[%s188 + $0x1f0] sm:$0xff]
        %v285 = vld [vmem:[%s188 + $0x1f8] sm:$0xff]
        %v286 = vmul.f32 %v222, %v222
        %v287 = vmul.f32 %v223, %v223
        %v288 = vmul.f32 %v224, %v224
        %v289 = vmul.f32 %v225, %v225
        %v290 = vmul.f32 %v226, %v226
        %v291 = vmul.f32 %v227, %v227
        %v292 = vmul.f32 %v228, %v228
        %v293 = vmul.f32 %v229, %v229
        %v294 = vmul.f32 %v230, %v230
        %v295 = vmul.f32 %v231, %v231
        %v296 = vmul.f32 %v232, %v232
        %v297 = vmul.f32 %v233, %v233
        %v298 = vmul.f32 %v234, %v234
        %v299 = vmul.f32 %v235, %v235
        %v300 = vmul.f32 %v236, %v236
        %v301 = vmul.f32 %v237, %v237
        %v302 = vmul.f32 %v238, %v238
        %v303 = vmul.f32 %v239, %v239
        %v304 = vmul.f32 %v240, %v240
        %v305 = vmul.f32 %v241, %v241
        %v306 = vmul.f32 %v242, %v242
        %v307 = vmul.f32 %v243, %v243
        %v308 = vmul.f32 %v244, %v244
        %v309 = vmul.f32 %v245, %v245
        %v310 = vmul.f32 %v246, %v246
        %v311 = vmul.f32 %v247, %v247
        %v312 = vmul.f32 %v248, %v248
        %v313 = vmul.f32 %v249, %v249
        %v314 = vmul.f32 %v250, %v250
        %v315 = vmul.f32 %v251, %v251
        %v316 = vmul.f32 %v252, %v252
        %v317 = vmul.f32 %v253, %v253
        %v318 = vmul.f32 %v254, %v254
        %v319 = vmul.f32 %v255, %v255
        %v320 = vmul.f32 %v256, %v256
        %v321 = vmul.f32 %v257, %v257
        %v322 = vmul.f32 %v258, %v258
        %v323 = vmul.f32 %v259, %v259
        %v324 = vmul.f32 %v260, %v260
        %v325 = vmul.f32 %v261, %v261
        %v326 = vmul.f32 %v262, %v262
        %v327 = vmul.f32 %v263, %v263
        %v328 = vmul.f32 %v264, %v264
        %v329 = vmul.f32 %v265, %v265
        %v330 = vmul.f32 %v266, %v266
        %v331 = vmul.f32 %v267, %v267
        %v332 = vmul.f32 %v268, %v268
        %v333 = vmul.f32 %v269, %v269
        %v334 = vmul.f32 %v270, %v270
        %v335 = vmul.f32 %v271, %v271
        %v336 = vmul.f32 %v272, %v272
        %v337 = vmul.f32 %v273, %v273
        %v338 = vmul.f32 %v274, %v274
        %v339 = vmul.f32 %v275, %v275
        %v340 = vmul.f32 %v276, %v276
        %v341 = vmul.f32 %v277, %v277
        %v342 = vmul.f32 %v278, %v278
        %v343 = vmul.f32 %v279, %v279
        %v344 = vmul.f32 %v280, %v280
        %v345 = vmul.f32 %v281, %v281
        %v346 = vmul.f32 %v282, %v282
        %v347 = vmul.f32 %v283, %v283
        %v348 = vmul.f32 %v284, %v284
        %v349 = vmul.f32 %v285, %v285
        %v350 = vadd.f32 %v286, %v287
        %v351 = vadd.f32 %v350, %v288
        %v352 = vadd.f32 %v351, %v289
        %353 = vadd.xlane.f32.xlu0 %v352
        %v354 = vpop.xlane.xlu0 %353
        %v355 = vadd.f32 %v290, %v291
        %v356 = vadd.f32 %v355, %v292
        %v357 = vadd.f32 %v356, %v293
        %358 = vadd.xlane.f32.xlu0 %v357
        %v359 = vpop.xlane.xlu0 %358
        %v360 = vadd.f32 %v294, %v295
        %v361 = vadd.f32 %v360, %v296
        %v362 = vadd.f32 %v361, %v297
        %363 = vadd.xlane.f32.xlu0 %v362
        %v364 = vpop.xlane.xlu0 %363
        %v365 = vadd.f32 %v298, %v299
        %v366 = vadd.f32 %v365, %v300
        %v367 = vadd.f32 %v366, %v301
        %368 = vadd.xlane.f32.xlu0 %v367
        %v369 = vpop.xlane.xlu0 %368
        %v370 = vadd.f32 %v302, %v303
        %v371 = vadd.f32 %v370, %v304
        %v372 = vadd.f32 %v371, %v305
        %373 = vadd.xlane.f32.xlu0 %v372
        %v374 = vpop.xlane.xlu0 %373
        %v375 = vadd.f32 %v306, %v307
        %v376 = vadd.f32 %v375, %v308
        %v377 = vadd.f32 %v376, %v309
        %378 = vadd.xlane.f32.xlu0 %v377
        %v379 = vpop.xlane.xlu0 %378
        %v380 = vadd.f32 %v310, %v311
        %v381 = vadd.f32 %v380, %v312
        %v382 = vadd.f32 %v381, %v313
        %383 = vadd.xlane.f32.xlu0 %v382
        %v384 = vpop.xlane.xlu0 %383
        %v385 = vadd.f32 %v314, %v315
        %v386 = vadd.f32 %v385, %v316
        %v387 = vadd.f32 %v386, %v317
        %388 = vadd.xlane.f32.xlu0 %v387
        %v389 = vpop.xlane.xlu0 %388
        %v390 = vadd.f32 %v318, %v319
        %v391 = vadd.f32 %v390, %v320
        %v392 = vadd.f32 %v391, %v321
        %393 = vadd.xlane.f32.xlu0 %v392
        %v394 = vpop.xlane.xlu0 %393
        %v395 = vadd.f32 %v322, %v323
        %v396 = vadd.f32 %v395, %v324
        %v397 = vadd.f32 %v396, %v325
        %398 = vadd.xlane.f32.xlu0 %v397
        %v399 = vpop.xlane.xlu0 %398
        %v400 = vadd.f32 %v326, %v327
        %v401 = vadd.f32 %v400, %v328
        %v402 = vadd.f32 %v401, %v329
        %403 = vadd.xlane.f32.xlu0 %v402
        %v404 = vpop.xlane.xlu0 %403
        %v405 = vadd.f32 %v330, %v331
        %v406 = vadd.f32 %v405, %v332
        %v407 = vadd.f32 %v406, %v333
        %408 = vadd.xlane.f32.xlu0 %v407
        %v409 = vpop.xlane.xlu0 %408
        %v410 = vadd.f32 %v334, %v335
        %v411 = vadd.f32 %v410, %v336
        %v412 = vadd.f32 %v411, %v337
        %413 = vadd.xlane.f32.xlu0 %v412
        %v414 = vpop.xlane.xlu0 %413
        %v415 = vadd.f32 %v338, %v339
        %v416 = vadd.f32 %v415, %v340
        %v417 = vadd.f32 %v416, %v341
        %418 = vadd.xlane.f32.xlu0 %v417
        %v419 = vpop.xlane.xlu0 %418
        %v420 = vadd.f32 %v342, %v343
        %v421 = vadd.f32 %v420, %v344
        %v422 = vadd.f32 %v421, %v345
        %423 = vadd.xlane.f32.xlu0 %v422
        %v424 = vpop.xlane.xlu0 %423
        %v425 = vadd.f32 %v346, %v347
        %v426 = vadd.f32 %v425, %v348
        %v427 = vadd.f32 %v426, %v349
        %428 = vadd.xlane.f32.xlu0 %v427
        %v429 = vpop.xlane.xlu0 %428
        %v430 = vmax.f32 %v354, 1e-24
        %v431 = vmax.f32 %v359, 1e-24
        %v432 = vmax.f32 %v364, 1e-24
        %v433 = vmax.f32 %v369, 1e-24
        %v434 = vmax.f32 %v374, 1e-24
        %v435 = vmax.f32 %v379, 1e-24
        %v436 = vmax.f32 %v384, 1e-24
        %v437 = vmax.f32 %v389, 1e-24
        %v438 = vmax.f32 %v394, 1e-24
        %v439 = vmax.f32 %v399, 1e-24
        %v440 = vmax.f32 %v404, 1e-24
        %v441 = vmax.f32 %v409, 1e-24
        %v442 = vmax.f32 %v414, 1e-24
        %v443 = vmax.f32 %v419, 1e-24
        %v444 = vmax.f32 %v424, 1e-24
        %v445 = vmax.f32 %v429, 1e-24
        %v446 = vrsqrt.pop %v430
        %v447 = vrsqrt.pop %v431
        %v448 = vrsqrt.pop %v432
        %v449 = vrsqrt.pop %v433
        %v450 = vrsqrt.pop %v434
        %v451 = vrsqrt.pop %v435
        %v452 = vrsqrt.pop %v436
        %v453 = vrsqrt.pop %v437
        %v454 = vrsqrt.pop %v438
        %v455 = vrsqrt.pop %v439
        %v456 = vrsqrt.pop %v440
        %v457 = vrsqrt.pop %v441
        %v458 = vrsqrt.pop %v442
        %v459 = vrsqrt.pop %v443
        %v460 = vrsqrt.pop %v444
        %v461 = vrsqrt.pop %v445
        %v462 = vmul.f32 %v222, %v446
        %v463 = vmul.f32 %v223, %v446
        %v464 = vmul.f32 %v224, %v446
        %v465 = vmul.f32 %v225, %v446
        %v466 = vmul.f32 %v226, %v447
        %v467 = vmul.f32 %v227, %v447
        %v468 = vmul.f32 %v228, %v447
        %v469 = vmul.f32 %v229, %v447
        %v470 = vmul.f32 %v230, %v448
        %v471 = vmul.f32 %v231, %v448
        %v472 = vmul.f32 %v232, %v448
        %v473 = vmul.f32 %v233, %v448
        %v474 = vmul.f32 %v234, %v449
        %v475 = vmul.f32 %v235, %v449
        %v476 = vmul.f32 %v236, %v449
        %v477 = vmul.f32 %v237, %v449
        %v478 = vmul.f32 %v238, %v450
        %v479 = vmul.f32 %v239, %v450
        %v480 = vmul.f32 %v240, %v450
        %v481 = vmul.f32 %v241, %v450
        %v482 = vmul.f32 %v242, %v451
        %v483 = vmul.f32 %v243, %v451
        %v484 = vmul.f32 %v244, %v451
        %v485 = vmul.f32 %v245, %v451
        %v486 = vmul.f32 %v246, %v452
        %v487 = vmul.f32 %v247, %v452
        %v488 = vmul.f32 %v248, %v452
        %v489 = vmul.f32 %v249, %v452
        %v490 = vmul.f32 %v250, %v453
        %v491 = vmul.f32 %v251, %v453
        %v492 = vmul.f32 %v252, %v453
        %v493 = vmul.f32 %v253, %v453
        %v494 = vmul.f32 %v254, %v454
        %v495 = vmul.f32 %v255, %v454
        %v496 = vmul.f32 %v256, %v454
        %v497 = vmul.f32 %v257, %v454
        %v498 = vmul.f32 %v258, %v455
        %v499 = vmul.f32 %v259, %v455
        %v500 = vmul.f32 %v260, %v455
        %v501 = vmul.f32 %v261, %v455
        %v502 = vmul.f32 %v262, %v456
        %v503 = vmul.f32 %v263, %v456
        %v504 = vmul.f32 %v264, %v456
        %v505 = vmul.f32 %v265, %v456
        %v506 = vmul.f32 %v266, %v457
        %v507 = vmul.f32 %v267, %v457
        %v508 = vmul.f32 %v268, %v457
        %v509 = vmul.f32 %v269, %v457
        %v510 = vmul.f32 %v270, %v458
        %v511 = vmul.f32 %v271, %v458
        %v512 = vmul.f32 %v272, %v458
        %v513 = vmul.f32 %v273, %v458
        %v514 = vmul.f32 %v274, %v459
        %v515 = vmul.f32 %v275, %v459
        %v516 = vmul.f32 %v276, %v459
        %v517 = vmul.f32 %v277, %v459
        %v518 = vmul.f32 %v278, %v460
        %v519 = vmul.f32 %v279, %v460
        %v520 = vmul.f32 %v280, %v460
        %v521 = vmul.f32 %v281, %v460
        %v522 = vmul.f32 %v282, %v461
        %v523 = vmul.f32 %v283, %v461
        %v524 = vmul.f32 %v284, %v461
        %v525 = vmul.f32 %v285, %v461
        %v526 = vpack.c.bf16 %v466, %v462
        %v527 = vpack.c.bf16 %v467, %v463
        %v528 = vpack.c.bf16 %v468, %v464
        %v529 = vpack.c.bf16 %v469, %v465
        %v530 = vpack.c.bf16 %v474, %v470
        %v531 = vpack.c.bf16 %v475, %v471
        %v532 = vpack.c.bf16 %v476, %v472
        %v533 = vpack.c.bf16 %v477, %v473
        %v534 = vpack.c.bf16 %v482, %v478
        %v535 = vpack.c.bf16 %v483, %v479
        %v536 = vpack.c.bf16 %v484, %v480
        %v537 = vpack.c.bf16 %v485, %v481
        %v538 = vpack.c.bf16 %v490, %v486
        %v539 = vpack.c.bf16 %v491, %v487
        %v540 = vpack.c.bf16 %v492, %v488
        %v541 = vpack.c.bf16 %v493, %v489
        %v542 = vpack.c.bf16 %v498, %v494
        %v543 = vpack.c.bf16 %v499, %v495
        %v544 = vpack.c.bf16 %v500, %v496
        %v545 = vpack.c.bf16 %v501, %v497
        %v546 = vpack.c.bf16 %v506, %v502
        %v547 = vpack.c.bf16 %v507, %v503
        %v548 = vpack.c.bf16 %v508, %v504
        %v549 = vpack.c.bf16 %v509, %v505
        %v550 = vpack.c.bf16 %v514, %v510
        %v551 = vpack.c.bf16 %v515, %v511
        %v552 = vpack.c.bf16 %v516, %v512
        %v553 = vpack.c.bf16 %v517, %v513
        %v554 = vpack.c.bf16 %v522, %v518
        %v555 = vpack.c.bf16 %v523, %v519
        %v556 = vpack.c.bf16 %v524, %v520
        %v557 = vpack.c.bf16 %v525, %v521
        %v558 = vld [vmem:[#allocation5] sm:$0xf]
        %v559 = vld [vmem:[#allocation5 + $0x4] sm:$0xf]
        %v560 = vld [vmem:[#allocation5 + $0x8] sm:$0xf]
        %v561 = vld [vmem:[#allocation5 + $0xc] sm:$0xf]
        %v562 = vld [vmem:[#allocation5 + $0x10] sm:$0xf]
        %v563 = vld [vmem:[#allocation5 + $0x14] sm:$0xf]
        %v564 = vld [vmem:[#allocation5 + $0x18] sm:$0xf]
        %v565 = vld [vmem:[#allocation5 + $0x1c] sm:$0xf]
        %v566 = vld [vmem:[#allocation5 + $0x20] sm:$0xf]
        %v567 = vld [vmem:[#allocation5 + $0x24] sm:$0xf]
        %v568 = vld [vmem:[#allocation5 + $0x28] sm:$0xf]
        %v569 = vld [vmem:[#allocation5 + $0x2c] sm:$0xf]
        %v570 = vld [vmem:[#allocation5 + $0x30] sm:$0xf]
        %v571 = vld [vmem:[#allocation5 + $0x34] sm:$0xf]
        %v572 = vld [vmem:[#allocation5 + $0x38] sm:$0xf]
        %v573 = vld [vmem:[#allocation5 + $0x3c] sm:$0xf]
        %v574 = vld [vmem:[#allocation5 + $0x40] sm:$0xf]
        %v575 = vld [vmem:[#allocation5 + $0x44] sm:$0xf]
        %v576 = vld [vmem:[#allocation5 + $0x48] sm:$0xf]
        %v577 = vld [vmem:[#allocation5 + $0x4c] sm:$0xf]
        %v578 = vld [vmem:[#allocation5 + $0x50] sm:$0xf]
        %v579 = vld [vmem:[#allocation5 + $0x54] sm:$0xf]
        %v580 = vld [vmem:[#allocation5 + $0x58] sm:$0xf]
        %v581 = vld [vmem:[#allocation5 + $0x5c] sm:$0xf]
        %v582 = vld [vmem:[#allocation5 + $0x60] sm:$0xf]
        %v583 = vld [vmem:[#allocation5 + $0x64] sm:$0xf]
        %v584 = vld [vmem:[#allocation5 + $0x68] sm:$0xf]
        %v585 = vld [vmem:[#allocation5 + $0x6c] sm:$0xf]
        %v586 = vld [vmem:[#allocation5 + $0x70] sm:$0xf]
        %v587 = vld [vmem:[#allocation5 + $0x74] sm:$0xf]
        %v588 = vld [vmem:[#allocation5 + $0x78] sm:$0xf]
        %v589 = vld [vmem:[#allocation5 + $0x7c] sm:$0xf]
        %v590 = vld [vmem:[#allocation5 + $0x80] sm:$0xf]
        %v591 = vld [vmem:[#allocation5 + $0x84] sm:$0xf]
        %v592 = vld [vmem:[#allocation5 + $0x88] sm:$0xf]
        %v593 = vld [vmem:[#allocation5 + $0x8c] sm:$0xf]
        %v594 = vld [vmem:[#allocation5 + $0x90] sm:$0xf]
        %v595 = vld [vmem:[#allocation5 + $0x94] sm:$0xf]
        %v596 = vld [vmem:[#allocation5 + $0x98] sm:$0xf]
        %v597 = vld [vmem:[#allocation5 + $0x9c] sm:$0xf]
        %v598 = vld [vmem:[#allocation5 + $0xa0] sm:$0xf]
        %v599 = vld [vmem:[#allocation5 + $0xa4] sm:$0xf]
        %v600 = vld [vmem:[#allocation5 + $0xa8] sm:$0xf]
        %v601 = vld [vmem:[#allocation5 + $0xac] sm:$0xf]
        %v602 = vld [vmem:[#allocation5 + $0xb0] sm:$0xf]
        %v603 = vld [vmem:[#allocation5 + $0xb4] sm:$0xf]
        %v604 = vld [vmem:[#allocation5 + $0xb8] sm:$0xf]
        %v605 = vld [vmem:[#allocation5 + $0xbc] sm:$0xf]
        %v606 = vld [vmem:[#allocation5 + $0xc0] sm:$0xf]
        %v607 = vld [vmem:[#allocation5 + $0xc4] sm:$0xf]
        %v608 = vld [vmem:[#allocation5 + $0xc8] sm:$0xf]
        %v609 = vld [vmem:[#allocation5 + $0xcc] sm:$0xf]
        %v610 = vld [vmem:[#allocation5 + $0xd0] sm:$0xf]
        %v611 = vld [vmem:[#allocation5 + $0xd4] sm:$0xf]
        %v612 = vld [vmem:[#allocation5 + $0xd8] sm:$0xf]
        %v613 = vld [vmem:[#allocation5 + $0xdc] sm:$0xf]
        %v614 = vld [vmem:[#allocation5 + $0xe0] sm:$0xf]
        %v615 = vld [vmem:[#allocation5 + $0xe4] sm:$0xf]
        %v616 = vld [vmem:[#allocation5 + $0xe8] sm:$0xf]
        %v617 = vld [vmem:[#allocation5 + $0xec] sm:$0xf]
        %v618 = vld [vmem:[#allocation5 + $0xf0] sm:$0xf]
        %v619 = vld [vmem:[#allocation5 + $0xf4] sm:$0xf]
        %v620 = vld [vmem:[#allocation5 + $0xf8] sm:$0xf]
        %v621 = vld [vmem:[#allocation5 + $0xfc] sm:$0xf]
        %v686 = vunpack.c.l.b16 %v558
        %v687 = vunpack.c.l.b16 %v559
        %v688 = vunpack.c.l.b16 %v560
        %v689 = vunpack.c.l.b16 %v561
        %v690 = vunpack.c.l.b16 %v562
        %v691 = vunpack.c.l.b16 %v563
        %v692 = vunpack.c.l.b16 %v564
        %v693 = vunpack.c.l.b16 %v565
        %v694 = vunpack.c.l.b16 %v566
        %v695 = vunpack.c.l.b16 %v567
        %v696 = vunpack.c.l.b16 %v568
        %v697 = vunpack.c.l.b16 %v569
        %v698 = vunpack.c.l.b16 %v570
        %v699 = vunpack.c.l.b16 %v571
        %v700 = vunpack.c.l.b16 %v572
        %v701 = vunpack.c.l.b16 %v573
        %v702 = vunpack.c.l.b16 %v574
        %v703 = vunpack.c.l.b16 %v575
        %v704 = vunpack.c.l.b16 %v576
        %v705 = vunpack.c.l.b16 %v577
        %v706 = vunpack.c.l.b16 %v578
        %v707 = vunpack.c.l.b16 %v579
        %v708 = vunpack.c.l.b16 %v580
        %v709 = vunpack.c.l.b16 %v581
        %v710 = vunpack.c.l.b16 %v582
        %v711 = vunpack.c.l.b16 %v583
        %v712 = vunpack.c.l.b16 %v584
        %v713 = vunpack.c.l.b16 %v585
        %v714 = vunpack.c.l.b16 %v586
        %v715 = vunpack.c.l.b16 %v587
        %v716 = vunpack.c.l.b16 %v588
        %v717 = vunpack.c.l.b16 %v589
        %v718 = vunpack.c.l.b16 %v590
        %v719 = vunpack.c.l.b16 %v591
        %v720 = vunpack.c.l.b16 %v592
        %v721 = vunpack.c.l.b16 %v593
        %v722 = vunpack.c.l.b16 %v594
        %v723 = vunpack.c.l.b16 %v595
        %v724 = vunpack.c.l.b16 %v596
        %v725 = vunpack.c.l.b16 %v597
        %v726 = vunpack.c.l.b16 %v598
        %v727 = vunpack.c.l.b16 %v599
        %v728 = vunpack.c.l.b16 %v600
        %v729 = vunpack.c.l.b16 %v601
        %v730 = vunpack.c.l.b16 %v602
        %v731 = vunpack.c.l.b16 %v603
        %v732 = vunpack.c.l.b16 %v604
        %v733 = vunpack.c.l.b16 %v605
        %v734 = vunpack.c.l.b16 %v606
        %v735 = vunpack.c.l.b16 %v607
        %v736 = vunpack.c.l.b16 %v608
        %v737 = vunpack.c.l.b16 %v609
        %v738 = vunpack.c.l.b16 %v610
        %v739 = vunpack.c.l.b16 %v611
        %v740 = vunpack.c.l.b16 %v612
        %v741 = vunpack.c.l.b16 %v613
        %v742 = vunpack.c.l.b16 %v614
        %v743 = vunpack.c.l.b16 %v615
        %v744 = vunpack.c.l.b16 %v616
        %v745 = vunpack.c.l.b16 %v617
        %v746 = vunpack.c.l.b16 %v618
        %v747 = vunpack.c.l.b16 %v619
        %v748 = vunpack.c.l.b16 %v620
        %v749 = vunpack.c.l.b16 %v621
        %v750 = vpack.c.b16 %v687, %v686
        %v751 = vpack.c.b16 %v689, %v688
        %v752 = vpack.c.b16 %v691, %v690
        %v753 = vpack.c.b16 %v693, %v692
        %v754 = vpack.c.b16 %v695, %v694
        %v755 = vpack.c.b16 %v697, %v696
        %v756 = vpack.c.b16 %v699, %v698
        %v757 = vpack.c.b16 %v701, %v700
        %v758 = vpack.c.b16 %v703, %v702
        %v759 = vpack.c.b16 %v705, %v704
        %v760 = vpack.c.b16 %v707, %v706
        %v761 = vpack.c.b16 %v709, %v708
        %v762 = vpack.c.b16 %v711, %v710
        %v763 = vpack.c.b16 %v713, %v712
        %v764 = vpack.c.b16 %v715, %v714
        %v765 = vpack.c.b16 %v717, %v716
        %v766 = vpack.c.b16 %v719, %v718
        %v767 = vpack.c.b16 %v721, %v720
        %v768 = vpack.c.b16 %v723, %v722
        %v769 = vpack.c.b16 %v725, %v724
        %v770 = vpack.c.b16 %v727, %v726
        %v771 = vpack.c.b16 %v729, %v728
        %v772 = vpack.c.b16 %v731, %v730
        %v773 = vpack.c.b16 %v733, %v732
        %v774 = vpack.c.b16 %v735, %v734
        %v775 = vpack.c.b16 %v737, %v736
        %v776 = vpack.c.b16 %v739, %v738
        %v777 = vpack.c.b16 %v741, %v740
        %v778 = vpack.c.b16 %v743, %v742
        %v779 = vpack.c.b16 %v745, %v744
        %v780 = vpack.c.b16 %v747, %v746
        %v781 = vpack.c.b16 %v749, %v748
        %814 = vmatprep.subr.bf16.mxu0 0
        %815 = vmatpush1.bf16.msra.mxu0 %v757
        %816 = vmatprep.subr.bf16.mxu0 0
        %817 = vmatpush1.bf16.msra.mxu0 %v756
        %818 = vmatprep.subr.bf16.mxu0 0
        %819 = vmatpush1.bf16.msra.mxu0 %v755
        %820 = vmatprep.subr.bf16.mxu0 0
        %821 = vmatpush1.bf16.msra.mxu0 %v754
        %822 = vmatprep.subr.bf16.mxu0 0
        %823 = vmatpush1.bf16.msra.mxu0 %v753
        %824 = vmatprep.subr.bf16.mxu0 0
        %825 = vmatpush1.bf16.msra.mxu0 %v752
        %826 = vmatprep.subr.bf16.mxu0 0
        %827 = vmatpush1.bf16.msra.mxu0 %v751
        %828 = vmatprep.subr.bf16.mxu0 0
        %829 = vmatpush1.bf16.msra.mxu0 %v750
        %830 = vmatprep.subr.bf16.mxu0 0
        %831 = vmatpush2.bf16.msra.mxu0 %v765
        %832 = vmatprep.subr.bf16.mxu0 0
        %833 = vmatpush2.bf16.msra.mxu0 %v764
        %834 = vmatprep.subr.bf16.mxu0 0
        %835 = vmatpush2.bf16.msra.mxu0 %v763
        %836 = vmatprep.subr.bf16.mxu0 0
        %837 = vmatpush2.bf16.msra.mxu0 %v762
        %838 = vmatprep.subr.bf16.mxu0 0
        %839 = vmatpush2.bf16.msra.mxu0 %v761
        %840 = vmatprep.subr.bf16.mxu0 0
        %841 = vmatpush2.bf16.msra.mxu0 %v760
        %842 = vmatprep.subr.bf16.mxu0 0
        %843 = vmatpush2.bf16.msra.mxu0 %v759
        %844 = vmatprep.subr.bf16.mxu0 0
        %845 = vmatpush2.bf16.msra.mxu0 %v758
        %846 = vmatprep.mubr.bf16.mxu0 %v527
        %847 = vmatmul.mubr.bf16.gmra.mxu0 %v526
        %v848 = vpop.f32.mrf.mxu0
        %v849 = vadd.f32 0.0, %v848
        %v850 = vpop.f32.mrf.mxu0
        %v851 = vpop.f32.mrf.mxu0
        %v852 = vadd.f32 0.0, %v851
        %v853 = vpop.f32.mrf.mxu0
        %854 = vmatprep.mubr.bf16.mxu0 %v531
        %855 = vmatmul.mubr.bf16.gmra.mxu0 %v530
        %v856 = vpop.f32.mrf.mxu0
        %v857 = vadd.f32 0.0, %v856
        %v858 = vpop.f32.mrf.mxu0
        %v859 = vpop.f32.mrf.mxu0
        %v860 = vadd.f32 0.0, %v859
        %v861 = vpop.f32.mrf.mxu0
        %862 = vmatprep.mubr.bf16.mxu0 %v535
        %863 = vmatmul.mubr.bf16.gmra.mxu0 %v534
        %v864 = vpop.f32.mrf.mxu0
        %v865 = vadd.f32 0.0, %v864
        %v866 = vpop.f32.mrf.mxu0
        %v867 = vpop.f32.mrf.mxu0
        %v868 = vadd.f32 0.0, %v867
        %v869 = vpop.f32.mrf.mxu0
        %870 = vmatprep.mubr.bf16.mxu0 %v539
        %871 = vmatmul.mubr.bf16.gmra.mxu0 %v538
        %v872 = vpop.f32.mrf.mxu0
        %v873 = vadd.f32 0.0, %v872
        %v874 = vpop.f32.mrf.mxu0
        %v875 = vpop.f32.mrf.mxu0
        %v876 = vadd.f32 0.0, %v875
        %v877 = vpop.f32.mrf.mxu0
        %878 = vmatprep.mubr.bf16.mxu0 %v543
        %879 = vmatmul.mubr.bf16.gmra.mxu0 %v542
        %v880 = vpop.f32.mrf.mxu0
        %v881 = vadd.f32 0.0, %v880
        %v882 = vpop.f32.mrf.mxu0
        %v883 = vpop.f32.mrf.mxu0
        %v884 = vadd.f32 0.0, %v883
        %v885 = vpop.f32.mrf.mxu0
        %886 = vmatprep.mubr.bf16.mxu0 %v547
        %887 = vmatmul.mubr.bf16.gmra.mxu0 %v546
        %v888 = vpop.f32.mrf.mxu0
        %v889 = vadd.f32 0.0, %v888
        %v890 = vpop.f32.mrf.mxu0
        %v891 = vpop.f32.mrf.mxu0
        %v892 = vadd.f32 0.0, %v891
        %v893 = vpop.f32.mrf.mxu0
        %894 = vmatprep.mubr.bf16.mxu0 %v551
        %895 = vmatmul.mubr.bf16.gmra.mxu0 %v550
        %v896 = vpop.f32.mrf.mxu0
        %v897 = vadd.f32 0.0, %v896
        %v898 = vpop.f32.mrf.mxu0
        %v899 = vpop.f32.mrf.mxu0
        %v900 = vadd.f32 0.0, %v899
        %v901 = vpop.f32.mrf.mxu0
        %902 = vmatprep.mubr.bf16.mxu0 %v555
        %903 = vmatmul.mubr.bf16.gmra.mxu0 %v554
        %v904 = vpop.f32.mrf.mxu0
        %v905 = vadd.f32 0.0, %v904
        %v906 = vpop.f32.mrf.mxu0
        %v907 = vpop.f32.mrf.mxu0
        %v908 = vadd.f32 0.0, %v907
        %v909 = vpop.f32.mrf.mxu0
        %910 = vdwg.mxu0
        %911 = vmatprep.subr.bf16.mxu0 0
        %912 = vmatpush1.bf16.msra.mxu0 %v773
        %913 = vmatprep.subr.bf16.mxu0 0
        %914 = vmatpush1.bf16.msra.mxu0 %v772
        %915 = vmatprep.subr.bf16.mxu0 0
        %916 = vmatpush1.bf16.msra.mxu0 %v771
        %917 = vmatprep.subr.bf16.mxu0 0
        %918 = vmatpush1.bf16.msra.mxu0 %v770
        %919 = vmatprep.subr.bf16.mxu0 0
        %920 = vmatpush1.bf16.msra.mxu0 %v769
        %921 = vmatprep.subr.bf16.mxu0 0
        %922 = vmatpush1.bf16.msra.mxu0 %v768
        %923 = vmatprep.subr.bf16.mxu0 0
        %924 = vmatpush1.bf16.msra.mxu0 %v767
        %925 = vmatprep.subr.bf16.mxu0 0
        %926 = vmatpush1.bf16.msra.mxu0 %v766
        %927 = vmatprep.subr.bf16.mxu0 0
        %928 = vmatpush2.bf16.msra.mxu0 %v781
        %929 = vmatprep.subr.bf16.mxu0 0
        %930 = vmatpush2.bf16.msra.mxu0 %v780
        %931 = vmatprep.subr.bf16.mxu0 0
        %932 = vmatpush2.bf16.msra.mxu0 %v779
        %933 = vmatprep.subr.bf16.mxu0 0
        %934 = vmatpush2.bf16.msra.mxu0 %v778
        %935 = vmatprep.subr.bf16.mxu0 0
        %936 = vmatpush2.bf16.msra.mxu0 %v777
        %937 = vmatprep.subr.bf16.mxu0 0
        %938 = vmatpush2.bf16.msra.mxu0 %v776
        %939 = vmatprep.subr.bf16.mxu0 0
        %940 = vmatpush2.bf16.msra.mxu0 %v775
        %941 = vmatprep.subr.bf16.mxu0 0
        %942 = vmatpush2.bf16.msra.mxu0 %v774
        %943 = vmatprep.mubr.bf16.mxu0 %v529
        %944 = vmatmul.mubr.bf16.gmra.mxu0 %v528
        %v945 = vpop.f32.mrf.mxu0
        %v946 = vadd.f32 %v849, %v945
        %v947 = vpop.f32.mrf.mxu0
        %v948 = vpop.f32.mrf.mxu0
        %v949 = vadd.f32 %v852, %v948
        %v950 = vpop.f32.mrf.mxu0
        %951 = vmatprep.mubr.bf16.mxu0 %v533
        %952 = vmatmul.mubr.bf16.gmra.mxu0 %v532
        %v953 = vpop.f32.mrf.mxu0
        %v954 = vadd.f32 %v857, %v953
        %v955 = vpop.f32.mrf.mxu0
        %v956 = vpop.f32.mrf.mxu0
        %v957 = vadd.f32 %v860, %v956
        %v958 = vpop.f32.mrf.mxu0
        %959 = vmatprep.mubr.bf16.mxu0 %v537
        %960 = vmatmul.mubr.bf16.gmra.mxu0 %v536
        %v961 = vpop.f32.mrf.mxu0
        %v962 = vadd.f32 %v865, %v961
        %v963 = vpop.f32.mrf.mxu0
        %v964 = vpop.f32.mrf.mxu0
        %v965 = vadd.f32 %v868, %v964
        %v966 = vpop.f32.mrf.mxu0
        %967 = vmatprep.mubr.bf16.mxu0 %v541
        %968 = vmatmul.mubr.bf16.gmra.mxu0 %v540
        %v969 = vpop.f32.mrf.mxu0
        %v970 = vadd.f32 %v873, %v969
        %v971 = vpop.f32.mrf.mxu0
        %v972 = vpop.f32.mrf.mxu0
        %v973 = vadd.f32 %v876, %v972
        %v974 = vpop.f32.mrf.mxu0
        %975 = vmatprep.mubr.bf16.mxu0 %v545
        %976 = vmatmul.mubr.bf16.gmra.mxu0 %v544
        %v977 = vpop.f32.mrf.mxu0
        %v978 = vadd.f32 %v881, %v977
        %v979 = vpop.f32.mrf.mxu0
        %v980 = vpop.f32.mrf.mxu0
        %v981 = vadd.f32 %v884, %v980
        %v982 = vpop.f32.mrf.mxu0
        %983 = vmatprep.mubr.bf16.mxu0 %v549
        %984 = vmatmul.mubr.bf16.gmra.mxu0 %v548
        %v985 = vpop.f32.mrf.mxu0
        %v986 = vadd.f32 %v889, %v985
        %v987 = vpop.f32.mrf.mxu0
        %v988 = vpop.f32.mrf.mxu0
        %v989 = vadd.f32 %v892, %v988
        %v990 = vpop.f32.mrf.mxu0
        %991 = vmatprep.mubr.bf16.mxu0 %v553
        %992 = vmatmul.mubr.bf16.gmra.mxu0 %v552
        %v993 = vpop.f32.mrf.mxu0
        %v994 = vadd.f32 %v897, %v993
        %v995 = vpop.f32.mrf.mxu0
        %v996 = vpop.f32.mrf.mxu0
        %v997 = vadd.f32 %v900, %v996
        %v998 = vpop.f32.mrf.mxu0
        %999 = vmatprep.mubr.bf16.mxu0 %v557
        %1000 = vmatmul.mubr.bf16.gmra.mxu0 %v556
        %v1001 = vpop.f32.mrf.mxu0
        %v1002 = vadd.f32 %v905, %v1001
        %v1003 = vpop.f32.mrf.mxu0
        %v1004 = vpop.f32.mrf.mxu0
        %v1005 = vadd.f32 %v908, %v1004
        %v1006 = vpop.f32.mrf.mxu0
        %1007 = vdwg.mxu0
        %v1008 = vmax.f32 %v946, 0.0
        %v1009 = vmax.f32 %v949, 0.0
        %v1010 = vmax.f32 %v954, 0.0
        %v1011 = vmax.f32 %v957, 0.0
        %v1012 = vmax.f32 %v962, 0.0
        %v1013 = vmax.f32 %v965, 0.0
        %v1014 = vmax.f32 %v970, 0.0
        %v1015 = vmax.f32 %v973, 0.0
        %v1016 = vmax.f32 %v978, 0.0
        %v1017 = vmax.f32 %v981, 0.0
        %v1018 = vmax.f32 %v986, 0.0
        %v1019 = vmax.f32 %v989, 0.0
        %v1020 = vmax.f32 %v994, 0.0
        %v1021 = vmax.f32 %v997, 0.0
        %v1022 = vmax.f32 %v1002, 0.0
        %v1023 = vmax.f32 %v1005, 0.0
        %v1024 = vpack.c.bf16 %v1009, %v1008
        %v1025 = vpack.c.bf16 %v1011, %v1010
        %v1026 = vpack.c.bf16 %v1013, %v1012
        %v1027 = vpack.c.bf16 %v1015, %v1014
        %v1028 = vpack.c.bf16 %v1017, %v1016
        %v1029 = vpack.c.bf16 %v1019, %v1018
        %v1030 = vpack.c.bf16 %v1021, %v1020
        %v1031 = vpack.c.bf16 %v1023, %v1022
        %v1032 = vld [vmem:[#allocation7] sm:$0xff]
        %v1033 = vld [vmem:[#allocation7 + $0x8] sm:$0xff]
        %v1034 = vld [vmem:[#allocation7 + $0x10] sm:$0xff]
        %v1035 = vld [vmem:[#allocation7 + $0x18] sm:$0xff]
        %v1036 = vld [vmem:[#allocation7 + $0x20] sm:$0xff]
        %v1037 = vld [vmem:[#allocation7 + $0x28] sm:$0xff]
        %v1038 = vld [vmem:[#allocation7 + $0x30] sm:$0xff]
        %v1039 = vld [vmem:[#allocation7 + $0x38] sm:$0xff]
        %v1040 = vld [vmem:[#allocation7 + $0x40] sm:$0xff]
        %v1041 = vld [vmem:[#allocation7 + $0x48] sm:$0xff]
        %v1042 = vld [vmem:[#allocation7 + $0x50] sm:$0xff]
        %v1043 = vld [vmem:[#allocation7 + $0x58] sm:$0xff]
        %v1044 = vld [vmem:[#allocation7 + $0x60] sm:$0xff]
        %v1045 = vld [vmem:[#allocation7 + $0x68] sm:$0xff]
        %v1046 = vld [vmem:[#allocation7 + $0x70] sm:$0xff]
        %v1047 = vld [vmem:[#allocation7 + $0x78] sm:$0xff]
        %v1048 = vld [vmem:[#allocation7 + $0x80] sm:$0xff]
        %v1049 = vld [vmem:[#allocation7 + $0x88] sm:$0xff]
        %v1050 = vld [vmem:[#allocation7 + $0x90] sm:$0xff]
        %v1051 = vld [vmem:[#allocation7 + $0x98] sm:$0xff]
        %v1052 = vld [vmem:[#allocation7 + $0xa0] sm:$0xff]
        %v1053 = vld [vmem:[#allocation7 + $0xa8] sm:$0xff]
        %v1054 = vld [vmem:[#allocation7 + $0xb0] sm:$0xff]
        %v1055 = vld [vmem:[#allocation7 + $0xb8] sm:$0xff]
        %v1056 = vld [vmem:[#allocation7 + $0xc0] sm:$0xff]
        %v1057 = vld [vmem:[#allocation7 + $0xc8] sm:$0xff]
        %v1058 = vld [vmem:[#allocation7 + $0xd0] sm:$0xff]
        %v1059 = vld [vmem:[#allocation7 + $0xd8] sm:$0xff]
        %v1060 = vld [vmem:[#allocation7 + $0xe0] sm:$0xff]
        %v1061 = vld [vmem:[#allocation7 + $0xe8] sm:$0xff]
        %v1062 = vld [vmem:[#allocation7 + $0xf0] sm:$0xff]
        %v1063 = vld [vmem:[#allocation7 + $0xf8] sm:$0xff]
        %v1096 = vunpack.c.l.b16 %v1032
        %v1097 = vunpack.c.h.b16 %v1032
        %v1098 = vunpack.c.l.b16 %v1033
        %v1099 = vunpack.c.h.b16 %v1033
        %v1100 = vunpack.c.l.b16 %v1034
        %v1101 = vunpack.c.h.b16 %v1034
        %v1102 = vunpack.c.l.b16 %v1035
        %v1103 = vunpack.c.h.b16 %v1035
        %v1104 = vunpack.c.l.b16 %v1036
        %v1105 = vunpack.c.h.b16 %v1036
        %v1106 = vunpack.c.l.b16 %v1037
        %v1107 = vunpack.c.h.b16 %v1037
        %v1108 = vunpack.c.l.b16 %v1038
        %v1109 = vunpack.c.h.b16 %v1038
        %v1110 = vunpack.c.l.b16 %v1039
        %v1111 = vunpack.c.h.b16 %v1039
        %v1112 = vunpack.c.l.b16 %v1040
        %v1113 = vunpack.c.h.b16 %v1040
        %v1114 = vunpack.c.l.b16 %v1041
        %v1115 = vunpack.c.h.b16 %v1041
        %v1116 = vunpack.c.l.b16 %v1042
        %v1117 = vunpack.c.h.b16 %v1042
        %v1118 = vunpack.c.l.b16 %v1043
        %v1119 = vunpack.c.h.b16 %v1043
        %v1120 = vunpack.c.l.b16 %v1044
        %v1121 = vunpack.c.h.b16 %v1044
        %v1122 = vunpack.c.l.b16 %v1045
        %v1123 = vunpack.c.h.b16 %v1045
        %v1124 = vunpack.c.l.b16 %v1046
        %v1125 = vunpack.c.h.b16 %v1046
        %v1126 = vunpack.c.l.b16 %v1047
        %v1127 = vunpack.c.h.b16 %v1047
        %v1128 = vunpack.c.l.b16 %v1048
        %v1129 = vunpack.c.h.b16 %v1048
        %v1130 = vunpack.c.l.b16 %v1049
        %v1131 = vunpack.c.h.b16 %v1049
        %v1132 = vunpack.c.l.b16 %v1050
        %v1133 = vunpack.c.h.b16 %v1050
        %v1134 = vunpack.c.l.b16 %v1051
        %v1135 = vunpack.c.h.b16 %v1051
        %v1136 = vunpack.c.l.b16 %v1052
        %v1137 = vunpack.c.h.b16 %v1052
        %v1138 = vunpack.c.l.b16 %v1053
        %v1139 = vunpack.c.h.b16 %v1053
        %v1140 = vunpack.c.l.b16 %v1054
        %v1141 = vunpack.c.h.b16 %v1054
        %v1142 = vunpack.c.l.b16 %v1055
        %v1143 = vunpack.c.h.b16 %v1055
        %v1144 = vunpack.c.l.b16 %v1056
        %v1145 = vunpack.c.h.b16 %v1056
        %v1146 = vunpack.c.l.b16 %v1057
        %v1147 = vunpack.c.h.b16 %v1057
        %v1148 = vunpack.c.l.b16 %v1058
        %v1149 = vunpack.c.h.b16 %v1058
        %v1150 = vunpack.c.l.b16 %v1059
        %v1151 = vunpack.c.h.b16 %v1059
        %v1152 = vunpack.c.l.b16 %v1060
        %v1153 = vunpack.c.h.b16 %v1060
        %v1154 = vunpack.c.l.b16 %v1061
        %v1155 = vunpack.c.h.b16 %v1061
        %v1156 = vunpack.c.l.b16 %v1062
        %v1157 = vunpack.c.h.b16 %v1062
        %v1158 = vunpack.c.l.b16 %v1063
        %v1159 = vunpack.c.h.b16 %v1063
        %v1160 = vpack.c.b16 %v1100, %v1096
        %v1161 = vpack.c.b16 %v1101, %v1097
        %v1162 = vpack.c.b16 %v1102, %v1098
        %v1163 = vpack.c.b16 %v1103, %v1099
        %v1164 = vpack.c.b16 %v1108, %v1104
        %v1165 = vpack.c.b16 %v1109, %v1105
        %v1166 = vpack.c.b16 %v1110, %v1106
        %v1167 = vpack.c.b16 %v1111, %v1107
        %v1168 = vpack.c.b16 %v1116, %v1112
        %v1169 = vpack.c.b16 %v1117, %v1113
        %v1170 = vpack.c.b16 %v1118, %v1114
        %v1171 = vpack.c.b16 %v1119, %v1115
        %v1172 = vpack.c.b16 %v1124, %v1120
        %v1173 = vpack.c.b16 %v1125, %v1121
        %v1174 = vpack.c.b16 %v1126, %v1122
        %v1175 = vpack.c.b16 %v1127, %v1123
        %v1176 = vpack.c.b16 %v1132, %v1128
        %v1177 = vpack.c.b16 %v1133, %v1129
        %v1178 = vpack.c.b16 %v1134, %v1130
        %v1179 = vpack.c.b16 %v1135, %v1131
        %v1180 = vpack.c.b16 %v1140, %v1136
        %v1181 = vpack.c.b16 %v1141, %v1137
        %v1182 = vpack.c.b16 %v1142, %v1138
        %v1183 = vpack.c.b16 %v1143, %v1139
        %v1184 = vpack.c.b16 %v1148, %v1144
        %v1185 = vpack.c.b16 %v1149, %v1145
        %v1186 = vpack.c.b16 %v1150, %v1146
        %v1187 = vpack.c.b16 %v1151, %v1147
        %v1188 = vpack.c.b16 %v1156, %v1152
        %v1189 = vpack.c.b16 %v1157, %v1153
        %v1190 = vpack.c.b16 %v1158, %v1154
        %v1191 = vpack.c.b16 %v1159, %v1155
        %1224 = vmatprep.subr.bf16.mxu0 %v1189
        %1225 = vmatpush1.bf16.msra.mxu0 %v1188
        %1226 = vmatprep.subr.bf16.mxu0 %v1185
        %1227 = vmatpush1.bf16.msra.mxu0 %v1184
        %1228 = vmatprep.subr.bf16.mxu0 %v1181
        %1229 = vmatpush1.bf16.msra.mxu0 %v1180
        %1230 = vmatprep.subr.bf16.mxu0 %v1177
        %1231 = vmatpush1.bf16.msra.mxu0 %v1176
        %1232 = vmatprep.subr.bf16.mxu0 %v1173
        %1233 = vmatpush1.bf16.msra.mxu0 %v1172
        %1234 = vmatprep.subr.bf16.mxu0 %v1169
        %1235 = vmatpush1.bf16.msra.mxu0 %v1168
        %1236 = vmatprep.subr.bf16.mxu0 %v1165
        %1237 = vmatpush1.bf16.msra.mxu0 %v1164
        %1238 = vmatprep.subr.bf16.mxu0 %v1161
        %1239 = vmatpush1.bf16.msra.mxu0 %v1160
        %1240 = vmatprep.subr.bf16.mxu0 0
        %1241 = vmatpush2.bf16.msra.mxu0 0
        %1242 = vmatprep.subr.bf16.mxu0 0
        %1243 = vmatpush2.bf16.msra.mxu0 0
        %1244 = vmatprep.subr.bf16.mxu0 0
        %1245 = vmatpush2.bf16.msra.mxu0 0
        %1246 = vmatprep.subr.bf16.mxu0 0
        %1247 = vmatpush2.bf16.msra.mxu0 0
        %1248 = vmatprep.subr.bf16.mxu0 0
        %1249 = vmatpush2.bf16.msra.mxu0 0
        %1250 = vmatprep.subr.bf16.mxu0 0
        %1251 = vmatpush2.bf16.msra.mxu0 0
        %1252 = vmatprep.subr.bf16.mxu0 0
        %1253 = vmatpush2.bf16.msra.mxu0 0
        %1254 = vmatprep.subr.bf16.mxu0 0
        %1255 = vmatpush2.bf16.msra.mxu0 0
        %1256 = vmatprep.mubr.bf16.mxu0 0
        %1257 = vmatmul.mubr.bf16.gmra.mxu0 %v1024
        %v1258 = vpop.f32.mrf.mxu0
        %v1259 = vadd.f32 0.0, %v1258
        %v1260 = vpop.f32.mrf.mxu0
        %v1261 = vadd.f32 0.0, %v1260
        %v1262 = vpop.f32.mrf.mxu0
        %v1263 = vadd.f32 0.0, %v1262
        %v1264 = vpop.f32.mrf.mxu0
        %v1265 = vadd.f32 0.0, %v1264
        %1266 = vmatprep.mubr.bf16.mxu0 0
        %1267 = vmatmul.mubr.bf16.gmra.mxu0 %v1025
        %v1268 = vpop.f32.mrf.mxu0
        %v1269 = vadd.f32 0.0, %v1268
        %v1270 = vpop.f32.mrf.mxu0
        %v1271 = vadd.f32 0.0, %v1270
        %v1272 = vpop.f32.mrf.mxu0
        %v1273 = vadd.f32 0.0, %v1272
        %v1274 = vpop.f32.mrf.mxu0
        %v1275 = vadd.f32 0.0, %v1274
        %1276 = vmatprep.mubr.bf16.mxu0 0
        %1277 = vmatmul.mubr.bf16.gmra.mxu0 %v1026
        %v1278 = vpop.f32.mrf.mxu0
        %v1279 = vadd.f32 0.0, %v1278
        %v1280 = vpop.f32.mrf.mxu0
        %v1281 = vadd.f32 0.0, %v1280
        %v1282 = vpop.f32.mrf.mxu0
        %v1283 = vadd.f32 0.0, %v1282
        %v1284 = vpop.f32.mrf.mxu0
        %v1285 = vadd.f32 0.0, %v1284
        %1286 = vmatprep.mubr.bf16.mxu0 0
        %1287 = vmatmul.mubr.bf16.gmra.mxu0 %v1027
        %v1288 = vpop.f32.mrf.mxu0
        %v1289 = vadd.f32 0.0, %v1288
        %v1290 = vpop.f32.mrf.mxu0
        %v1291 = vadd.f32 0.0, %v1290
        %v1292 = vpop.f32.mrf.mxu0
        %v1293 = vadd.f32 0.0, %v1292
        %v1294 = vpop.f32.mrf.mxu0
        %v1295 = vadd.f32 0.0, %v1294
        %1296 = vmatprep.mubr.bf16.mxu0 0
        %1297 = vmatmul.mubr.bf16.gmra.mxu0 %v1028
        %v1298 = vpop.f32.mrf.mxu0
        %v1299 = vadd.f32 0.0, %v1298
        %v1300 = vpop.f32.mrf.mxu0
        %v1301 = vadd.f32 0.0, %v1300
        %v1302 = vpop.f32.mrf.mxu0
        %v1303 = vadd.f32 0.0, %v1302
        %v1304 = vpop.f32.mrf.mxu0
        %v1305 = vadd.f32 0.0, %v1304
        %1306 = vmatprep.mubr.bf16.mxu0 0
        %1307 = vmatmul.mubr.bf16.gmra.mxu0 %v1029
        %v1308 = vpop.f32.mrf.mxu0
        %v1309 = vadd.f32 0.0, %v1308
        %v1310 = vpop.f32.mrf.mxu0
        %v1311 = vadd.f32 0.0, %v1310
        %v1312 = vpop.f32.mrf.mxu0
        %v1313 = vadd.f32 0.0, %v1312
        %v1314 = vpop.f32.mrf.mxu0
        %v1315 = vadd.f32 0.0, %v1314
        %1316 = vmatprep.mubr.bf16.mxu0 0
        %1317 = vmatmul.mubr.bf16.gmra.mxu0 %v1030
        %v1318 = vpop.f32.mrf.mxu0
        %v1319 = vadd.f32 0.0, %v1318
        %v1320 = vpop.f32.mrf.mxu0
        %v1321 = vadd.f32 0.0, %v1320
        %v1322 = vpop.f32.mrf.mxu0
        %v1323 = vadd.f32 0.0, %v1322
        %v1324 = vpop.f32.mrf.mxu0
        %v1325 = vadd.f32 0.0, %v1324
        %1326 = vmatprep.mubr.bf16.mxu0 0
        %1327 = vmatmul.mubr.bf16.gmra.mxu0 %v1031
        %v1328 = vpop.f32.mrf.mxu0
        %v1329 = vadd.f32 0.0, %v1328
        %v1330 = vpop.f32.mrf.mxu0
        %v1331 = vadd.f32 0.0, %v1330
        %v1332 = vpop.f32.mrf.mxu0
        %v1333 = vadd.f32 0.0, %v1332
        %v1334 = vpop.f32.mrf.mxu0
        %v1335 = vadd.f32 0.0, %v1334
        %1336 = vdwg.mxu0
        %1337 = vmatprep.subr.bf16.mxu0 %v1191
        %1338 = vmatpush1.bf16.msra.mxu0 %v1190
        %1339 = vmatprep.subr.bf16.mxu0 %v1187
        %1340 = vmatpush1.bf16.msra.mxu0 %v1186
        %1341 = vmatprep.subr.bf16.mxu0 %v1183
        %1342 = vmatpush1.bf16.msra.mxu0 %v1182
        %1343 = vmatprep.subr.bf16.mxu0 %v1179
        %1344 = vmatpush1.bf16.msra.mxu0 %v1178
        %1345 = vmatprep.subr.bf16.mxu0 %v1175
        %1346 = vmatpush1.bf16.msra.mxu0 %v1174
        %1347 = vmatprep.subr.bf16.mxu0 %v1171
        %1348 = vmatpush1.bf16.msra.mxu0 %v1170
        %1349 = vmatprep.subr.bf16.mxu0 %v1167
        %1350 = vmatpush1.bf16.msra.mxu0 %v1166
        %1351 = vmatprep.subr.bf16.mxu0 %v1163
        %1352 = vmatpush1.bf16.msra.mxu0 %v1162
        %1353 = vmatprep.subr.bf16.mxu0 0
        %1354 = vmatpush2.bf16.msra.mxu0 0
        %1355 = vmatprep.subr.bf16.mxu0 0
        %1356 = vmatpush2.bf16.msra.mxu0 0
        %1357 = vmatprep.subr.bf16.mxu0 0
        %1358 = vmatpush2.bf16.msra.mxu0 0
        %1359 = vmatprep.subr.bf16.mxu0 0
        %1360 = vmatpush2.bf16.msra.mxu0 0
        %1361 = vmatprep.subr.bf16.mxu0 0
        %1362 = vmatpush2.bf16.msra.mxu0 0
        %1363 = vmatprep.subr.bf16.mxu0 0
        %1364 = vmatpush2.bf16.msra.mxu0 0
        %1365 = vmatprep.subr.bf16.mxu0 0
        %1366 = vmatpush2.bf16.msra.mxu0 0
        %1367 = vmatprep.subr.bf16.mxu0 0
        %1368 = vmatpush2.bf16.msra.mxu0 0
        %1369 = vmatprep.mubr.bf16.mxu0 0
        %1370 = vmatmul.mubr.bf16.gmra.mxu0 %v1024
        %v1371 = vpop.f32.mrf.mxu0
        %v1372 = vadd.f32 0.0, %v1371
        %v1373 = vpop.f32.mrf.mxu0
        %v1374 = vadd.f32 0.0, %v1373
        %v1375 = vpop.f32.mrf.mxu0
        %v1376 = vadd.f32 0.0, %v1375
        %v1377 = vpop.f32.mrf.mxu0
        %v1378 = vadd.f32 0.0, %v1377
        %1379 = vmatprep.mubr.bf16.mxu0 0
        %1380 = vmatmul.mubr.bf16.gmra.mxu0 %v1025
        %v1381 = vpop.f32.mrf.mxu0
        %v1382 = vadd.f32 0.0, %v1381
        %v1383 = vpop.f32.mrf.mxu0
        %v1384 = vadd.f32 0.0, %v1383
        %v1385 = vpop.f32.mrf.mxu0
        %v1386 = vadd.f32 0.0, %v1385
        %v1387 = vpop.f32.mrf.mxu0
        %v1388 = vadd.f32 0.0, %v1387
        %1389 = vmatprep.mubr.bf16.mxu0 0
        %1390 = vmatmul.mubr.bf16.gmra.mxu0 %v1026
        %v1391 = vpop.f32.mrf.mxu0
        %v1392 = vadd.f32 0.0, %v1391
        %v1393 = vpop.f32.mrf.mxu0
        %v1394 = vadd.f32 0.0, %v1393
        %v1395 = vpop.f32.mrf.mxu0
        %v1396 = vadd.f32 0.0, %v1395
        %v1397 = vpop.f32.mrf.mxu0
        %v1398 = vadd.f32 0.0, %v1397
        %1399 = vmatprep.mubr.bf16.mxu0 0
        %1400 = vmatmul.mubr.bf16.gmra.mxu0 %v1027
        %v1401 = vpop.f32.mrf.mxu0
        %v1402 = vadd.f32 0.0, %v1401
        %v1403 = vpop.f32.mrf.mxu0
        %v1404 = vadd.f32 0.0, %v1403
        %v1405 = vpop.f32.mrf.mxu0
        %v1406 = vadd.f32 0.0, %v1405
        %v1407 = vpop.f32.mrf.mxu0
        %v1408 = vadd.f32 0.0, %v1407
        %1409 = vmatprep.mubr.bf16.mxu0 0
        %1410 = vmatmul.mubr.bf16.gmra.mxu0 %v1028
        %v1411 = vpop.f32.mrf.mxu0
        %v1412 = vadd.f32 0.0, %v1411
        %v1413 = vpop.f32.mrf.mxu0
        %v1414 = vadd.f32 0.0, %v1413
        %v1415 = vpop.f32.mrf.mxu0
        %v1416 = vadd.f32 0.0, %v1415
        %v1417 = vpop.f32.mrf.mxu0
        %v1418 = vadd.f32 0.0, %v1417
        %1419 = vmatprep.mubr.bf16.mxu0 0
        %1420 = vmatmul.mubr.bf16.gmra.mxu0 %v1029
        %v1421 = vpop.f32.mrf.mxu0
        %v1422 = vadd.f32 0.0, %v1421
        %v1423 = vpop.f32.mrf.mxu0
        %v1424 = vadd.f32 0.0, %v1423
        %v1425 = vpop.f32.mrf.mxu0
        %v1426 = vadd.f32 0.0, %v1425
        %v1427 = vpop.f32.mrf.mxu0
        %v1428 = vadd.f32 0.0, %v1427
        %1429 = vmatprep.mubr.bf16.mxu0 0
        %1430 = vmatmul.mubr.bf16.gmra.mxu0 %v1030
        %v1431 = vpop.f32.mrf.mxu0
        %v1432 = vadd.f32 0.0, %v1431
        %v1433 = vpop.f32.mrf.mxu0
        %v1434 = vadd.f32 0.0, %v1433
        %v1435 = vpop.f32.mrf.mxu0
        %v1436 = vadd.f32 0.0, %v1435
        %v1437 = vpop.f32.mrf.mxu0
        %v1438 = vadd.f32 0.0, %v1437
        %1439 = vmatprep.mubr.bf16.mxu0 0
        %1440 = vmatmul.mubr.bf16.gmra.mxu0 %v1031
        %v1441 = vpop.f32.mrf.mxu0
        %v1442 = vadd.f32 0.0, %v1441
        %v1443 = vpop.f32.mrf.mxu0
        %v1444 = vadd.f32 0.0, %v1443
        %v1445 = vpop.f32.mrf.mxu0
        %v1446 = vadd.f32 0.0, %v1445
        %v1447 = vpop.f32.mrf.mxu0
        %v1448 = vadd.f32 0.0, %v1447
        %1449 = vdwg.mxu0
        %v1450 = vmax.f32 %v1259, 0.0
        %v1451 = vmax.f32 %v1261, 0.0
        %v1452 = vmax.f32 %v1372, 0.0
        %v1453 = vmax.f32 %v1374, 0.0
        %v1454 = vmax.f32 %v1263, 0.0
        %v1455 = vmax.f32 %v1265, 0.0
        %v1456 = vmax.f32 %v1376, 0.0
        %v1457 = vmax.f32 %v1378, 0.0
        %v1458 = vmax.f32 %v1269, 0.0
        %v1459 = vmax.f32 %v1271, 0.0
        %v1460 = vmax.f32 %v1382, 0.0
        %v1461 = vmax.f32 %v1384, 0.0
        %v1462 = vmax.f32 %v1273, 0.0
        %v1463 = vmax.f32 %v1275, 0.0
        %v1464 = vmax.f32 %v1386, 0.0
        %v1465 = vmax.f32 %v1388, 0.0
        %v1466 = vmax.f32 %v1279, 0.0
        %v1467 = vmax.f32 %v1281, 0.0
        %v1468 = vmax.f32 %v1392, 0.0
        %v1469 = vmax.f32 %v1394, 0.0
        %v1470 = vmax.f32 %v1283, 0.0
        %v1471 = vmax.f32 %v1285, 0.0
        %v1472 = vmax.f32 %v1396, 0.0
        %v1473 = vmax.f32 %v1398, 0.0
        %v1474 = vmax.f32 %v1289, 0.0
        %v1475 = vmax.f32 %v1291, 0.0
        %v1476 = vmax.f32 %v1402, 0.0
        %v1477 = vmax.f32 %v1404, 0.0
        %v1478 = vmax.f32 %v1293, 0.0
        %v1479 = vmax.f32 %v1295, 0.0
        %v1480 = vmax.f32 %v1406, 0.0
        %v1481 = vmax.f32 %v1408, 0.0
        %v1482 = vmax.f32 %v1299, 0.0
        %v1483 = vmax.f32 %v1301, 0.0
        %v1484 = vmax.f32 %v1412, 0.0
        %v1485 = vmax.f32 %v1414, 0.0
        %v1486 = vmax.f32 %v1303, 0.0
        %v1487 = vmax.f32 %v1305, 0.0
        %v1488 = vmax.f32 %v1416, 0.0
        %v1489 = vmax.f32 %v1418, 0.0
        %v1490 = vmax.f32 %v1309, 0.0
        %v1491 = vmax.f32 %v1311, 0.0
        %v1492 = vmax.f32 %v1422, 0.0
        %v1493 = vmax.f32 %v1424, 0.0
        %v1494 = vmax.f32 %v1313, 0.0
        %v1495 = vmax.f32 %v1315, 0.0
        %v1496 = vmax.f32 %v1426, 0.0
        %v1497 = vmax.f32 %v1428, 0.0
        %v1498 = vmax.f32 %v1319, 0.0
        %v1499 = vmax.f32 %v1321, 0.0
        %v1500 = vmax.f32 %v1432, 0.0
        %v1501 = vmax.f32 %v1434, 0.0
        %v1502 = vmax.f32 %v1323, 0.0
        %v1503 = vmax.f32 %v1325, 0.0
        %v1504 = vmax.f32 %v1436, 0.0
        %v1505 = vmax.f32 %v1438, 0.0
        %v1506 = vmax.f32 %v1329, 0.0
        %v1507 = vmax.f32 %v1331, 0.0
        %v1508 = vmax.f32 %v1442, 0.0
        %v1509 = vmax.f32 %v1444, 0.0
        %v1510 = vmax.f32 %v1333, 0.0
        %v1511 = vmax.f32 %v1335, 0.0
        %v1512 = vmax.f32 %v1446, 0.0
        %v1513 = vmax.f32 %v1448, 0.0
        %v1514 = vmul.f32 %v1450, 0.6
        %v1515 = vmul.f32 %v1451, 0.6
        %v1516 = vmul.f32 %v1452, 0.6
        %v1517 = vmul.f32 %v1453, 0.6
        %v1518 = vmul.f32 %v1454, 0.6
        %v1519 = vmul.f32 %v1455, 0.6
        %v1520 = vmul.f32 %v1456, 0.6
        %v1521 = vmul.f32 %v1457, 0.6
        %v1522 = vmul.f32 %v1458, 0.6
        %v1523 = vmul.f32 %v1459, 0.6
        %v1524 = vmul.f32 %v1460, 0.6
        %v1525 = vmul.f32 %v1461, 0.6
        %v1526 = vmul.f32 %v1462, 0.6
        %v1527 = vmul.f32 %v1463, 0.6
        %v1528 = vmul.f32 %v1464, 0.6
        %v1529 = vmul.f32 %v1465, 0.6
        %v1530 = vmul.f32 %v1466, 0.6
        %v1531 = vmul.f32 %v1467, 0.6
        %v1532 = vmul.f32 %v1468, 0.6
        %v1533 = vmul.f32 %v1469, 0.6
        %v1534 = vmul.f32 %v1470, 0.6
        %v1535 = vmul.f32 %v1471, 0.6
        %v1536 = vmul.f32 %v1472, 0.6
        %v1537 = vmul.f32 %v1473, 0.6
        %v1538 = vmul.f32 %v1474, 0.6
        %v1539 = vmul.f32 %v1475, 0.6
        %v1540 = vmul.f32 %v1476, 0.6
        %v1541 = vmul.f32 %v1477, 0.6
        %v1542 = vmul.f32 %v1478, 0.6
        %v1543 = vmul.f32 %v1479, 0.6
        %v1544 = vmul.f32 %v1480, 0.6
        %v1545 = vmul.f32 %v1481, 0.6
        %v1546 = vmul.f32 %v1482, 0.6
        %v1547 = vmul.f32 %v1483, 0.6
        %v1548 = vmul.f32 %v1484, 0.6
        %v1549 = vmul.f32 %v1485, 0.6
        %v1550 = vmul.f32 %v1486, 0.6
        %v1551 = vmul.f32 %v1487, 0.6
        %v1552 = vmul.f32 %v1488, 0.6
        %v1553 = vmul.f32 %v1489, 0.6
        %v1554 = vmul.f32 %v1490, 0.6
        %v1555 = vmul.f32 %v1491, 0.6
        %v1556 = vmul.f32 %v1492, 0.6
        %v1557 = vmul.f32 %v1493, 0.6
        %v1558 = vmul.f32 %v1494, 0.6
        %v1559 = vmul.f32 %v1495, 0.6
        %v1560 = vmul.f32 %v1496, 0.6
        %v1561 = vmul.f32 %v1497, 0.6
        %v1562 = vmul.f32 %v1498, 0.6
        %v1563 = vmul.f32 %v1499, 0.6
        %v1564 = vmul.f32 %v1500, 0.6
        %v1565 = vmul.f32 %v1501, 0.6
        %v1566 = vmul.f32 %v1502, 0.6
        %v1567 = vmul.f32 %v1503, 0.6
        %v1568 = vmul.f32 %v1504, 0.6
        %v1569 = vmul.f32 %v1505, 0.6
        %v1570 = vmul.f32 %v1506, 0.6
        %v1571 = vmul.f32 %v1507, 0.6
        %v1572 = vmul.f32 %v1508, 0.6
        %v1573 = vmul.f32 %v1509, 0.6
        %v1574 = vmul.f32 %v1510, 0.6
        %v1575 = vmul.f32 %v1511, 0.6
        %v1576 = vmul.f32 %v1512, 0.6
        %v1577 = vmul.f32 %v1513, 0.6
        %v1578 = vmul.f32 %v462, 0.4
        %v1579 = vmul.f32 %v463, 0.4
        %v1580 = vmul.f32 %v464, 0.4
        %v1581 = vmul.f32 %v465, 0.4
        %v1582 = vmul.f32 %v466, 0.4
        %v1583 = vmul.f32 %v467, 0.4
        %v1584 = vmul.f32 %v468, 0.4
        %v1585 = vmul.f32 %v469, 0.4
        %v1586 = vmul.f32 %v470, 0.4
        %v1587 = vmul.f32 %v471, 0.4
        %v1588 = vmul.f32 %v472, 0.4
        %v1589 = vmul.f32 %v473, 0.4
        %v1590 = vmul.f32 %v474, 0.4
        %v1591 = vmul.f32 %v475, 0.4
        %v1592 = vmul.f32 %v476, 0.4
        %v1593 = vmul.f32 %v477, 0.4
        %v1594 = vmul.f32 %v478, 0.4
        %v1595 = vmul.f32 %v479, 0.4
        %v1596 = vmul.f32 %v480, 0.4
        %v1597 = vmul.f32 %v481, 0.4
        %v1598 = vmul.f32 %v482, 0.4
        %v1599 = vmul.f32 %v483, 0.4
        %v1600 = vmul.f32 %v484, 0.4
        %v1601 = vmul.f32 %v485, 0.4
        %v1602 = vmul.f32 %v486, 0.4
        %v1603 = vmul.f32 %v487, 0.4
        %v1604 = vmul.f32 %v488, 0.4
        %v1605 = vmul.f32 %v489, 0.4
        %v1606 = vmul.f32 %v490, 0.4
        %v1607 = vmul.f32 %v491, 0.4
        %v1608 = vmul.f32 %v492, 0.4
        %v1609 = vmul.f32 %v493, 0.4
        %v1610 = vmul.f32 %v494, 0.4
        %v1611 = vmul.f32 %v495, 0.4
        %v1612 = vmul.f32 %v496, 0.4
        %v1613 = vmul.f32 %v497, 0.4
        %v1614 = vmul.f32 %v498, 0.4
        %v1615 = vmul.f32 %v499, 0.4
        %v1616 = vmul.f32 %v500, 0.4
        %v1617 = vmul.f32 %v501, 0.4
        %v1618 = vmul.f32 %v502, 0.4
        %v1619 = vmul.f32 %v503, 0.4
        %v1620 = vmul.f32 %v504, 0.4
        %v1621 = vmul.f32 %v505, 0.4
        %v1622 = vmul.f32 %v506, 0.4
        %v1623 = vmul.f32 %v507, 0.4
        %v1624 = vmul.f32 %v508, 0.4
        %v1625 = vmul.f32 %v509, 0.4
        %v1626 = vmul.f32 %v510, 0.4
        %v1627 = vmul.f32 %v511, 0.4
        %v1628 = vmul.f32 %v512, 0.4
        %v1629 = vmul.f32 %v513, 0.4
        %v1630 = vmul.f32 %v514, 0.4
        %v1631 = vmul.f32 %v515, 0.4
        %v1632 = vmul.f32 %v516, 0.4
        %v1633 = vmul.f32 %v517, 0.4
        %v1634 = vmul.f32 %v518, 0.4
        %v1635 = vmul.f32 %v519, 0.4
        %v1636 = vmul.f32 %v520, 0.4
        %v1637 = vmul.f32 %v521, 0.4
        %v1638 = vmul.f32 %v522, 0.4
        %v1639 = vmul.f32 %v523, 0.4
        %v1640 = vmul.f32 %v524, 0.4
        %v1641 = vmul.f32 %v525, 0.4
        %v1642 = vadd.f32 %v1514, %v1578
        %v1643 = vadd.f32 %v1515, %v1579
        %v1644 = vadd.f32 %v1516, %v1580
        %v1645 = vadd.f32 %v1517, %v1581
        %v1646 = vadd.f32 %v1518, %v1582
        %v1647 = vadd.f32 %v1519, %v1583
        %v1648 = vadd.f32 %v1520, %v1584
        %v1649 = vadd.f32 %v1521, %v1585
        %v1650 = vadd.f32 %v1522, %v1586
        %v1651 = vadd.f32 %v1523, %v1587
        %v1652 = vadd.f32 %v1524, %v1588
        %v1653 = vadd.f32 %v1525, %v1589
        %v1654 = vadd.f32 %v1526, %v1590
        %v1655 = vadd.f32 %v1527, %v1591
        %v1656 = vadd.f32 %v1528, %v1592
        %v1657 = vadd.f32 %v1529, %v1593
        %v1658 = vadd.f32 %v1530, %v1594
        %v1659 = vadd.f32 %v1531, %v1595
        %v1660 = vadd.f32 %v1532, %v1596
        %v1661 = vadd.f32 %v1533, %v1597
        %v1662 = vadd.f32 %v1534, %v1598
        %v1663 = vadd.f32 %v1535, %v1599
        %v1664 = vadd.f32 %v1536, %v1600
        %v1665 = vadd.f32 %v1537, %v1601
        %v1666 = vadd.f32 %v1538, %v1602
        %v1667 = vadd.f32 %v1539, %v1603
        %v1668 = vadd.f32 %v1540, %v1604
        %v1669 = vadd.f32 %v1541, %v1605
        %v1670 = vadd.f32 %v1542, %v1606
        %v1671 = vadd.f32 %v1543, %v1607
        %v1672 = vadd.f32 %v1544, %v1608
        %v1673 = vadd.f32 %v1545, %v1609
        %v1674 = vadd.f32 %v1546, %v1610
        %v1675 = vadd.f32 %v1547, %v1611
        %v1676 = vadd.f32 %v1548, %v1612
        %v1677 = vadd.f32 %v1549, %v1613
        %v1678 = vadd.f32 %v1550, %v1614
        %v1679 = vadd.f32 %v1551, %v1615
        %v1680 = vadd.f32 %v1552, %v1616
        %v1681 = vadd.f32 %v1553, %v1617
        %v1682 = vadd.f32 %v1554, %v1618
        %v1683 = vadd.f32 %v1555, %v1619
        %v1684 = vadd.f32 %v1556, %v1620
        %v1685 = vadd.f32 %v1557, %v1621
        %v1686 = vadd.f32 %v1558, %v1622
        %v1687 = vadd.f32 %v1559, %v1623
        %v1688 = vadd.f32 %v1560, %v1624
        %v1689 = vadd.f32 %v1561, %v1625
        %v1690 = vadd.f32 %v1562, %v1626
        %v1691 = vadd.f32 %v1563, %v1627
        %v1692 = vadd.f32 %v1564, %v1628
        %v1693 = vadd.f32 %v1565, %v1629
        %v1694 = vadd.f32 %v1566, %v1630
        %v1695 = vadd.f32 %v1567, %v1631
        %v1696 = vadd.f32 %v1568, %v1632
        %v1697 = vadd.f32 %v1569, %v1633
        %v1698 = vadd.f32 %v1570, %v1634
        %v1699 = vadd.f32 %v1571, %v1635
        %v1700 = vadd.f32 %v1572, %v1636
        %v1701 = vadd.f32 %v1573, %v1637
        %v1702 = vadd.f32 %v1574, %v1638
        %v1703 = vadd.f32 %v1575, %v1639
        %v1704 = vadd.f32 %v1576, %v1640
        %v1705 = vadd.f32 %v1577, %v1641
        %1706 = vst [vmem:[%s218] sm:$0xff] %v1642
        %1707 = vst [vmem:[%s218 + $0x8] sm:$0xff] %v1643
        %1708 = vst [vmem:[%s218 + $0x10] sm:$0xff] %v1644
        %1709 = vst [vmem:[%s218 + $0x18] sm:$0xff] %v1645
        %1710 = vst [vmem:[%s218 + $0x20] sm:$0xff] %v1646
        %1711 = vst [vmem:[%s218 + $0x28] sm:$0xff] %v1647
        %1712 = vst [vmem:[%s218 + $0x30] sm:$0xff] %v1648
        %1713 = vst [vmem:[%s218 + $0x38] sm:$0xff] %v1649
        %1714 = vst [vmem:[%s218 + $0x40] sm:$0xff] %v1650
        %1715 = vst [vmem:[%s218 + $0x48] sm:$0xff] %v1651
        %1716 = vst [vmem:[%s218 + $0x50] sm:$0xff] %v1652
        %1717 = vst [vmem:[%s218 + $0x58] sm:$0xff] %v1653
        %1718 = vst [vmem:[%s218 + $0x60] sm:$0xff] %v1654
        %1719 = vst [vmem:[%s218 + $0x68] sm:$0xff] %v1655
        %1720 = vst [vmem:[%s218 + $0x70] sm:$0xff] %v1656
        %1721 = vst [vmem:[%s218 + $0x78] sm:$0xff] %v1657
        %1722 = vst [vmem:[%s218 + $0x80] sm:$0xff] %v1658
        %1723 = vst [vmem:[%s218 + $0x88] sm:$0xff] %v1659
        %1724 = vst [vmem:[%s218 + $0x90] sm:$0xff] %v1660
        %1725 = vst [vmem:[%s218 + $0x98] sm:$0xff] %v1661
        %1726 = vst [vmem:[%s218 + $0xa0] sm:$0xff] %v1662
        %1727 = vst [vmem:[%s218 + $0xa8] sm:$0xff] %v1663
        %1728 = vst [vmem:[%s218 + $0xb0] sm:$0xff] %v1664
        %1729 = vst [vmem:[%s218 + $0xb8] sm:$0xff] %v1665
        %1730 = vst [vmem:[%s218 + $0xc0] sm:$0xff] %v1666
        %1731 = vst [vmem:[%s218 + $0xc8] sm:$0xff] %v1667
        %1732 = vst [vmem:[%s218 + $0xd0] sm:$0xff] %v1668
        %1733 = vst [vmem:[%s218 + $0xd8] sm:$0xff] %v1669
        %1734 = vst [vmem:[%s218 + $0xe0] sm:$0xff] %v1670
        %1735 = vst [vmem:[%s218 + $0xe8] sm:$0xff] %v1671
        %1736 = vst [vmem:[%s218 + $0xf0] sm:$0xff] %v1672
        %1737 = vst [vmem:[%s218 + $0xf8] sm:$0xff] %v1673
        %1738 = vst [vmem:[%s218 + $0x100] sm:$0xff] %v1674
        %1739 = vst [vmem:[%s218 + $0x108] sm:$0xff] %v1675
        %1740 = vst [vmem:[%s218 + $0x110] sm:$0xff] %v1676
        %1741 = vst [vmem:[%s218 + $0x118] sm:$0xff] %v1677
        %1742 = vst [vmem:[%s218 + $0x120] sm:$0xff] %v1678
        %1743 = vst [vmem:[%s218 + $0x128] sm:$0xff] %v1679
        %1744 = vst [vmem:[%s218 + $0x130] sm:$0xff] %v1680
        %1745 = vst [vmem:[%s218 + $0x138] sm:$0xff] %v1681
        %1746 = vst [vmem:[%s218 + $0x140] sm:$0xff] %v1682
        %1747 = vst [vmem:[%s218 + $0x148] sm:$0xff] %v1683
        %1748 = vst [vmem:[%s218 + $0x150] sm:$0xff] %v1684
        %1749 = vst [vmem:[%s218 + $0x158] sm:$0xff] %v1685
        %1750 = vst [vmem:[%s218 + $0x160] sm:$0xff] %v1686
        %1751 = vst [vmem:[%s218 + $0x168] sm:$0xff] %v1687
        %1752 = vst [vmem:[%s218 + $0x170] sm:$0xff] %v1688
        %1753 = vst [vmem:[%s218 + $0x178] sm:$0xff] %v1689
        %1754 = vst [vmem:[%s218 + $0x180] sm:$0xff] %v1690
        %1755 = vst [vmem:[%s218 + $0x188] sm:$0xff] %v1691
        %1756 = vst [vmem:[%s218 + $0x190] sm:$0xff] %v1692
        %1757 = vst [vmem:[%s218 + $0x198] sm:$0xff] %v1693
        %1758 = vst [vmem:[%s218 + $0x1a0] sm:$0xff] %v1694
        %1759 = vst [vmem:[%s218 + $0x1a8] sm:$0xff] %v1695
        %1760 = vst [vmem:[%s218 + $0x1b0] sm:$0xff] %v1696
        %1761 = vst [vmem:[%s218 + $0x1b8] sm:$0xff] %v1697
        %1762 = vst [vmem:[%s218 + $0x1c0] sm:$0xff] %v1698
        %1763 = vst [vmem:[%s218 + $0x1c8] sm:$0xff] %v1699
        %1764 = vst [vmem:[%s218 + $0x1d0] sm:$0xff] %v1700
        %1765 = vst [vmem:[%s218 + $0x1d8] sm:$0xff] %v1701
        %1766 = vst [vmem:[%s218 + $0x1e0] sm:$0xff] %v1702
        %1767 = vst [vmem:[%s218 + $0x1e8] sm:$0xff] %v1703
        %1768 = vst [vmem:[%s218 + $0x1f0] sm:$0xff] %v1704
        %1769 = vst [vmem:[%s218 + $0x1f8] sm:$0xff] %v1705
        %s1770 = sand.u32 %s97, 1
        %s1771 = scalar_lea.sflag [#allocation4], %s1770
        %s1772 = sand.u32 %s97, 1
        %s1773 = smul.addr %s1772, 512
        %s1774 = scalar_lea.vmem [#allocation8], %s1773
        // Predicated region
        $region45: #{tpu_custom_call.1} parent=31 // pred_check
          %p1775 = pneg %p107
        $region46: #{tpu_custom_call.1} parent=31 // pred_check_branch
          %1777 = sbr.rel (%p1775) target = $region48
        $region47: #{tpu_custom_call.1} parent=31 // pred_region
          %s1778 = smul.u32 16, %s21
          %s1780 = ssub.s32 8192, 8192
          %1781 = vsyncadd %s1771, %s1780
          %s1782 = smul.addr %s1778, 4
          %s1783 = smul.addr %s1782, 128
          %s1784 = scalar_lea.hbm %s3, %s1783
          %s1785 = sshll.u32 %s1774, 4
          %s1786 = int_to_ptr.vmem [resolvable:$true] %s1785
          %1791 = dma.vmem_to_hbm [thread:$0]  %s1786, 8192, %s1784, %s1771, 512, 512, 32
        $region48: #{tpu_custom_call.1} parent=31 // pred_fallthru
          _
      $region32: #{tpu_custom_call.1} parent=5 // pred_fallthru
        _
      %p1792 = scmp.le.s32.totalorder 2, %s16
      // Predicated region
      $region49: #{tpu_custom_call.1} parent=5 // pred_check
        %p1793 = pneg %p1792
      $region50: #{tpu_custom_call.1} parent=5 // pred_check_branch
        %1795 = sbr.rel (%p1793) target = $region52
      $region51: #{tpu_custom_call.1} parent=5 // pred_region
        %s1796 = ssub.s32 %s16, 2
        // Predicated region
        $region53: #{tpu_custom_call.1} parent=51 // pred_check
          %p1797 = pneg %p113
        $region54: #{tpu_custom_call.1} parent=51 // pred_check_branch
          %1799 = sbr.rel (%p1797) target = $region56
        $region55: #{tpu_custom_call.1} parent=51 // pred_region
          %s1800 = sand.u32 %s98, 1
          %s1801 = scalar_lea.sflag [#allocation4], %s1800
          %s1802 = sand.u32 %s98, 1
          %s1803 = smul.addr %s1802, 512
          %s1804 = scalar_lea.vmem [#allocation8], %s1803
          %1805 = dma.done %s1801, 8192
        $region56: #{tpu_custom_call.1} parent=51 // pred_fallthru
          _
      $region52: #{tpu_custom_call.1} parent=5 // pred_fallthru
        _
    $region6: #{tpu_custom_call.1} parent=1 // loop_footer
      %s20 = sadd.s32 1, %s16
    $region7: #{tpu_custom_call.1} parent=1 // loop_footer_branch
      %15 = sbr.rel target = $region3
    $region8: #{tpu_custom_call.1} parent=1 // loop_exit
      _
    %1806 = vsyncpa [#allocation3], 1
    %s1807 = scalar_lea.sflag [#allocation3], 1
    %1808 = vsyncpa %s1807, 1
    %1809 = vsyncpa [#allocation6], 1
    %1810 = vsyncpa [#allocation4], 1
    %s1811 = scalar_lea.sflag [#allocation4], 1
    %1812 = vsyncpa %s1811, 1

</llo_original>
